<compile_context>
chip_gen: v5e
topology: v5e:2x2
jax: 0.10.0
libtpu: 0.0.40
codegen_flags: <defaults>
</compile_context>

<pallas_src>
import functools

import jax
import jax.numpy as jnp
import numpy as np
from jax import lax
from jax.experimental import pallas as pl
from jax.experimental.pallas import tpu as pltpu


def _mha_kernel(xq_ref, xk_ref, xv_ref, mask_ref,
                wq_ref, wk_ref, wv_ref, wo_ref,
                bq_ref, bk_ref, bv_ref, bo_ref,
                out_ref, score_ref, *, n_heads, head_dim):
    xq = xq_ref[0]                      # (seq, d_model)
    xk = xk_ref[0]
    xv = xv_ref[0]

    # Fused full-width projections (PyTorch Linear: y = x @ W.T + b).
    q = jnp.dot(xq, wq_ref[...], preferred_element_type=jnp.float32) + bq_ref[...]
    k = jnp.dot(xk, wk_ref[...], preferred_element_type=jnp.float32) + bk_ref[...]
    v = jnp.dot(xv, wv_ref[...], preferred_element_type=jnp.float32) + bv_ref[...]

    m_is_zero = mask_ref[0, 0] == 0     # (seq, seq), integer compare

    # Per-head attention, statically unrolled (n_heads is small & static).
    ctx_parts = []
    for h in range(n_heads):
        lo = h * head_dim
        q_h = q[:, lo:lo + head_dim]    # static lane slices of the fused proj
        k_h = k[:, lo:lo + head_dim]
        v_h = v[:, lo:lo + head_dim]

        # q_h @ k_h^T without an explicit transpose: contract the last dims.
        s = lax.dot_general(q_h, k_h, (((1,), (1,)), ((), ())),
                            preferred_element_type=jnp.float32)   # (seq, seq)

        # masked_fill(mask == 0, -1e-12) — faithful to the reference module
        # (yes, -1e-12; and no 1/sqrt(head_dim) scaling).
        s = jnp.where(m_is_zero, jnp.float32(-1e-12), s)

        # Numerically stable softmax; reciprocal goes to the EUP slot.
        s_max = jnp.max(s, axis=-1, keepdims=True)
        p = jnp.exp(s - s_max)
        p = p * pl.reciprocal(jnp.sum(p, axis=-1, keepdims=True), approx=True)
        score_ref[0, h] = p

        ctx_parts.append(jnp.dot(p, v_h, preferred_element_type=jnp.float32))

    # Concatenate head contexts along lanes -> (seq, d_model), then one fused
    # full-width output projection.
    ctx = jnp.concatenate(ctx_parts, axis=-1)
    out_ref[0] = (jnp.dot(ctx, wo_ref[...], preferred_element_type=jnp.float32)
                  + bo_ref[...])


def multihead_attention(xq, xk, xv, mask, params, n_heads):
    bs, seq, d_model = xq.shape
    head_dim = d_model // n_heads
    Wq, bq, Wk, bk, Wv, bv, Wo, bo = params

    # Lane-dense full-width weight tiles (pre-transposed for y = x @ W.T + b).
    wq_t, wk_t, wv_t, wo_t = Wq.T, Wk.T, Wv.T, Wo.T
    bq_2d = bq.reshape(1, d_model)
    bk_2d = bk.reshape(1, d_model)
    bv_2d = bv.reshape(1, d_model)
    bo_2d = bo.reshape(1, d_model)

    # Integer mask (broadcast to per-batch (bs, 1, seq, seq)).
    mask_i = jnp.broadcast_to(mask, (bs, 1, seq, seq)).astype(jnp.int32)

    grid = (bs,)
    act_spec = pl.BlockSpec((1, seq, d_model), lambda b: (b, 0, 0))
    w_spec = pl.BlockSpec((d_model, d_model), lambda b: (0, 0))
    b_spec = pl.BlockSpec((1, d_model), lambda b: (0, 0))

    kernel = functools.partial(_mha_kernel, n_heads=n_heads, head_dim=head_dim)

    out, score = pl.pallas_call(
        kernel,
        grid=grid,
        in_specs=[
            act_spec, act_spec, act_spec,                               # xq, xk, xv
            pl.BlockSpec((1, 1, seq, seq), lambda b: (b, 0, 0, 0)),     # mask
            w_spec, w_spec, w_spec, w_spec,                             # Wq^T, Wk^T, Wv^T, Wo^T
            b_spec, b_spec, b_spec, b_spec,                             # bq, bk, bv, bo
        ],
        out_specs=[
            pl.BlockSpec((1, seq, d_model), lambda b: (b, 0, 0)),       # output
            pl.BlockSpec((1, n_heads, seq, seq), lambda b: (b, 0, 0, 0)),  # score
        ],
        out_shape=[
            jax.ShapeDtypeStruct((bs, seq, d_model), jnp.float32),
            jax.ShapeDtypeStruct((bs, n_heads, seq, seq), jnp.float32),
        ],
        compiler_params=pltpu.CompilerParams(
            dimension_semantics=("parallel",)),
    )(xq, xk, xv, mask_i,
      wq_t, wk_t, wv_t, wo_t,
      bq_2d, bk_2d, bv_2d, bo_2d)
    return out, score


def _reference_mha(xq, xk, xv, mask, params, n_heads):
    """Pure-JAX reference matching the PyTorch module semantics."""
    Wq, bq, Wk, bk, Wv, bv, Wo, bo = params
    bs, seq, d_model = xq.shape
    hd = d_model // n_heads
    q = xq @ Wq.T + bq
    k = xk @ Wk.T + bk
    v = xv @ Wv.T + bv
    q = q.reshape(bs, seq, n_heads, hd).transpose(0, 2, 1, 3)
    k = k.reshape(bs, seq, n_heads, hd).transpose(0, 2, 1, 3)
    v = v.reshape(bs, seq, n_heads, hd).transpose(0, 2, 1, 3)
    s = q @ jnp.swapaxes(k, -1, -2)
    s = jnp.where(mask == 0, jnp.float32(-1e-12), s)
    score = jax.nn.softmax(s, axis=-1)
    ctx = score @ v
    result = ctx.transpose(0, 2, 1, 3).reshape(bs, seq, d_model)
    out = result @ Wo.T + bo
    return out, score


if __name__ == "__main__":
    # Small shapes consistent with the module (d_model % n_heads == 0).
    bs, seq, d_model, n_heads = 2, 8, 32, 4

    key = jax.random.PRNGKey(0)
    keys = jax.random.split(key, 12)
    xq = jax.random.normal(keys[0], (bs, seq, d_model), jnp.float32)
    xk = jax.random.normal(keys[1], (bs, seq, d_model), jnp.float32)
    xv = jax.random.normal(keys[2], (bs, seq, d_model), jnp.float32)

    # nn.Linear weight shape: (out_features, in_features).
    def w(k):
        return 0.1 * jax.random.normal(k, (d_model, d_model), jnp.float32)

    def b(k):
        return 0.1 * jax.random.normal(k, (d_model,), jnp.float32)

    params = (w(keys[3]), b(keys[4]),   # q
              w(keys[5]), b(keys[6]),   # k
              w(keys[7]), b(keys[8]),   # v
              w(keys[9]), b(keys[10]))  # out

    # Causal mask, broadcastable to (bs, n_heads, seq, seq) like in PyTorch.
    mask = jnp.tril(jnp.ones((seq, seq), jnp.float32))[None, None, :, :]
    mask = jnp.broadcast_to(mask, (bs, 1, seq, seq))

    out, score = multihead_attention(xq, xk, xv, mask, params, n_heads)
    out = jax.block_until_ready(out)
    score = jax.block_until_ready(score)

    ref_out, ref_score = _reference_mha(xq, xk, xv, mask, params, n_heads)
    # Tolerance accommodates the EUP approximate reciprocal in the softmax.
    np.testing.assert_allclose(np.asarray(out), np.asarray(ref_out),
                               atol=2e-3, rtol=2e-3)
    np.testing.assert_allclose(np.asarray(score), np.asarray(ref_score),
                               atol=2e-3, rtol=2e-3)

    print("KERNEL_OK")
</pallas_src>

<mosaic_0001>
module attributes {stable_mosaic.version = 11 : i64} {
  func.func @_mha_kernel(%arg0: i32, %arg1: memref<1x8x32xf32, #tpu.memory_space<vmem>>, %arg2: memref<1x8x32xf32, #tpu.memory_space<vmem>>, %arg3: memref<1x8x32xf32, #tpu.memory_space<vmem>>, %arg4: memref<1x1x8x8xi32, #tpu.memory_space<vmem>>, %arg5: memref<32x32xf32, #tpu.memory_space<vmem>>, %arg6: memref<32x32xf32, #tpu.memory_space<vmem>>, %arg7: memref<32x32xf32, #tpu.memory_space<vmem>>, %arg8: memref<32x32xf32, #tpu.memory_space<vmem>>, %arg9: memref<1x32xf32, #tpu.memory_space<vmem>>, %arg10: memref<1x32xf32, #tpu.memory_space<vmem>>, %arg11: memref<1x32xf32, #tpu.memory_space<vmem>>, %arg12: memref<1x32xf32, #tpu.memory_space<vmem>>, %arg13: memref<1x8x32xf32, #tpu.memory_space<vmem>>, %arg14: memref<1x4x8x8xf32, #tpu.memory_space<vmem>>) attributes {dimension_semantics = [#tpu.dimension_semantics<parallel>], iteration_bounds = array<i64: 2>, scalar_prefetch = 0 : i64, scratch_operands = 0 : i64, tpu.core_type = #tpu.core_type<tc>, window_params = [{transform_indices = @transform_0, window_bounds = array<i64: 1, 8, 32>}, {transform_indices = @transform_1, window_bounds = array<i64: 1, 8, 32>}, {transform_indices = @transform_2, window_bounds = array<i64: 1, 8, 32>}, {transform_indices = @transform_3, window_bounds = array<i64: 1, 1, 8, 8>}, {pipeline_mode = #tpu.pipeline_mode<synchronous>, transform_indices = @transform_4, window_bounds = array<i64: 32, 32>}, {pipeline_mode = #tpu.pipeline_mode<synchronous>, transform_indices = @transform_5, window_bounds = array<i64: 32, 32>}, {pipeline_mode = #tpu.pipeline_mode<synchronous>, transform_indices = @transform_6, window_bounds = array<i64: 32, 32>}, {pipeline_mode = #tpu.pipeline_mode<synchronous>, transform_indices = @transform_7, window_bounds = array<i64: 32, 32>}, {pipeline_mode = #tpu.pipeline_mode<synchronous>, transform_indices = @transform_8, window_bounds = array<i64: 1, 32>}, {pipeline_mode = #tpu.pipeline_mode<synchronous>, transform_indices = @transform_9, window_bounds = array<i64: 1, 32>}, {pipeline_mode = #tpu.pipeline_mode<synchronous>, transform_indices = @transform_10, window_bounds = array<i64: 1, 32>}, {pipeline_mode = #tpu.pipeline_mode<synchronous>, transform_indices = @transform_11, window_bounds = array<i64: 1, 32>}, {transform_indices = @transform_12, window_bounds = array<i64: 1, 8, 32>}, {transform_indices = @transform_13, window_bounds = array<i64: 1, 4, 8, 8>}]} {
    %c0 = arith.constant 0 : index
    %c0_0 = arith.constant 0 : index
    %c0_1 = arith.constant 0 : index
    %0 = vector.load %arg1[%c0, %c0_0, %c0_1] : memref<1x8x32xf32, #tpu.memory_space<vmem>>, vector<1x8x32xf32>
    %1 = vector.shape_cast %0 : vector<1x8x32xf32> to vector<8x32xf32>
    %c0_2 = arith.constant 0 : index
    %c0_3 = arith.constant 0 : index
    %c0_4 = arith.constant 0 : index
    %2 = vector.load %arg2[%c0_2, %c0_3, %c0_4] : memref<1x8x32xf32, #tpu.memory_space<vmem>>, vector<1x8x32xf32>
    %3 = vector.shape_cast %2 : vector<1x8x32xf32> to vector<8x32xf32>
    %c0_5 = arith.constant 0 : index
    %c0_6 = arith.constant 0 : index
    %c0_7 = arith.constant 0 : index
    %4 = vector.load %arg3[%c0_5, %c0_6, %c0_7] : memref<1x8x32xf32, #tpu.memory_space<vmem>>, vector<1x8x32xf32>
    %5 = vector.shape_cast %4 : vector<1x8x32xf32> to vector<8x32xf32>
    %c0_8 = arith.constant 0 : index
    %c0_9 = arith.constant 0 : index
    %6 = vector.load %arg5[%c0_8, %c0_9] : memref<32x32xf32, #tpu.memory_space<vmem>>, vector<32x32xf32>
    %cst = arith.constant dense<0.000000e+00> : vector<8x32xf32>
    %7 = tpu.matmul %1, %6, %cst {dimension_numbers = #tpu.dot_dimension_numbers<[1], [0], [0], [1], [0, 0, 1, 1], [], []>} : vector<8x32xf32>, vector<32x32xf32>, vector<8x32xf32> -> vector<8x32xf32>
    %c0_10 = arith.constant 0 : index
    %c0_11 = arith.constant 0 : index
    %8 = vector.load %arg9[%c0_10, %c0_11] : memref<1x32xf32, #tpu.memory_space<vmem>>, vector<1x32xf32>
    %9 = vector.broadcast %8 : vector<1x32xf32> to vector<8x32xf32>
    %10 = arith.addf %7, %9 : vector<8x32xf32>
    %c0_12 = arith.constant 0 : index
    %c0_13 = arith.constant 0 : index
    %11 = vector.load %arg6[%c0_12, %c0_13] : memref<32x32xf32, #tpu.memory_space<vmem>>, vector<32x32xf32>
    %cst_14 = arith.constant dense<0.000000e+00> : vector<8x32xf32>
    %12 = tpu.matmul %3, %11, %cst_14 {dimension_numbers = #tpu.dot_dimension_numbers<[1], [0], [0], [1], [0, 0, 1, 1], [], []>} : vector<8x32xf32>, vector<32x32xf32>, vector<8x32xf32> -> vector<8x32xf32>
    %c0_15 = arith.constant 0 : index
    %c0_16 = arith.constant 0 : index
    %13 = vector.load %arg10[%c0_15, %c0_16] : memref<1x32xf32, #tpu.memory_space<vmem>>, vector<1x32xf32>
    %14 = vector.broadcast %13 : vector<1x32xf32> to vector<8x32xf32>
    %15 = arith.addf %12, %14 : vector<8x32xf32>
    %c0_17 = arith.constant 0 : index
    %c0_18 = arith.constant 0 : index
    %16 = vector.load %arg7[%c0_17, %c0_18] : memref<32x32xf32, #tpu.memory_space<vmem>>, vector<32x32xf32>
    %cst_19 = arith.constant dense<0.000000e+00> : vector<8x32xf32>
    %17 = tpu.matmul %5, %16, %cst_19 {dimension_numbers = #tpu.dot_dimension_numbers<[1], [0], [0], [1], [0, 0, 1, 1], [], []>} : vector<8x32xf32>, vector<32x32xf32>, vector<8x32xf32> -> vector<8x32xf32>
    %c0_20 = arith.constant 0 : index
    %c0_21 = arith.constant 0 : index
    %18 = vector.load %arg11[%c0_20, %c0_21] : memref<1x32xf32, #tpu.memory_space<vmem>>, vector<1x32xf32>
    %19 = vector.broadcast %18 : vector<1x32xf32> to vector<8x32xf32>
    %20 = arith.addf %17, %19 : vector<8x32xf32>
    %c0_22 = arith.constant 0 : index
    %c0_23 = arith.constant 0 : index
    %c0_24 = arith.constant 0 : index
    %c0_25 = arith.constant 0 : index
    %21 = vector.load %arg4[%c0_22, %c0_23, %c0_24, %c0_25] : memref<1x1x8x8xi32, #tpu.memory_space<vmem>>, vector<1x1x8x8xi32>
    %22 = vector.shape_cast %21 : vector<1x1x8x8xi32> to vector<8x8xi32>
    %c0_i32 = arith.constant 0 : i32
    %23 = vector.broadcast %c0_i32 : i32 to vector<8x8xi32>
    %24 = arith.cmpi eq, %22, %23 : vector<8x8xi32>
    %25 = vector.extract_strided_slice %10 {offsets = [0, 0], sizes = [8, 8], strides = [1, 1]} : vector<8x32xf32> to vector<8x8xf32>
    %26 = vector.extract_strided_slice %15 {offsets = [0, 0], sizes = [8, 8], strides = [1, 1]} : vector<8x32xf32> to vector<8x8xf32>
    %27 = vector.extract_strided_slice %20 {offsets = [0, 0], sizes = [8, 8], strides = [1, 1]} : vector<8x32xf32> to vector<8x8xf32>
    %cst_26 = arith.constant dense<0.000000e+00> : vector<8x8xf32>
    %28 = tpu.matmul %25, %26, %cst_26 {dimension_numbers = #tpu.dot_dimension_numbers<[1], [1], [0], [0], [0, 0, 1, 0], [], []>} : vector<8x8xf32>, vector<8x8xf32>, vector<8x8xf32> -> vector<8x8xf32>
    %cst_27 = arith.constant -9.99999996E-13 : f32
    %29 = vector.broadcast %cst_27 : f32 to vector<8x8xf32>
    %30 = arith.select %24, %29, %28 : vector<8x8xi1>, vector<8x8xf32>
    %cst_28 = arith.constant dense<0xFF800000> : vector<8xf32>
    %31 = vector.multi_reduction <maximumf>, %30, %cst_28 [1] : vector<8x8xf32> to vector<8xf32>
    %32 = vector.shape_cast %31 : vector<8xf32> to vector<8x1xf32>
    %33 = vector.broadcast %32 : vector<8x1xf32> to vector<8x8xf32>
    %34 = arith.subf %30, %33 : vector<8x8xf32>
    %35 = math.exp %34 : vector<8x8xf32>
    %cst_29 = arith.constant dense<0.000000e+00> : vector<8xf32>
    %36 = vector.multi_reduction <add>, %35, %cst_29 [1] : vector<8x8xf32> to vector<8xf32>
    %37 = vector.shape_cast %36 : vector<8xf32> to vector<8x1xf32>
    %38 = tpu.reciprocal %37 {approx = true} : vector<8x1xf32> -> vector<8x1xf32>
    %39 = vector.broadcast %38 : vector<8x1xf32> to vector<8x8xf32>
    %40 = arith.mulf %35, %39 : vector<8x8xf32>
    %c0_30 = arith.constant 0 : index
    %c0_31 = arith.constant 0 : index
    %c0_32 = arith.constant 0 : index
    %c0_33 = arith.constant 0 : index
    %41 = vector.load %arg14[%c0_30, %c0_31, %c0_32, %c0_33] : memref<1x4x8x8xf32, #tpu.memory_space<vmem>>, vector<1x1x8x8xf32>
    %42 = vector.shape_cast %41 : vector<1x1x8x8xf32> to vector<8x8xf32>
    %43 = vector.shape_cast %40 : vector<8x8xf32> to vector<1x1x8x8xf32>
    tpu.vector_store %arg14[%c0_30, %c0_31, %c0_32, %c0_33], %43 {strides = array<i32>} : memref<1x4x8x8xf32, #tpu.memory_space<vmem>>, vector<1x1x8x8xf32>,
    %cst_34 = arith.constant dense<0.000000e+00> : vector<8x8xf32>
    %44 = tpu.matmul %40, %27, %cst_34 {dimension_numbers = #tpu.dot_dimension_numbers<[1], [0], [0], [1], [0, 0, 1, 1], [], []>} : vector<8x8xf32>, vector<8x8xf32>, vector<8x8xf32> -> vector<8x8xf32>
    %45 = vector.extract_strided_slice %10 {offsets = [0, 8], sizes = [8, 8], strides = [1, 1]} : vector<8x32xf32> to vector<8x8xf32>
    %46 = vector.extract_strided_slice %15 {offsets = [0, 8], sizes = [8, 8], strides = [1, 1]} : vector<8x32xf32> to vector<8x8xf32>
    %47 = vector.extract_strided_slice %20 {offsets = [0, 8], sizes = [8, 8], strides = [1, 1]} : vector<8x32xf32> to vector<8x8xf32>
    %cst_35 = arith.constant dense<0.000000e+00> : vector<8x8xf32>
    %48 = tpu.matmul %45, %46, %cst_35 {dimension_numbers = #tpu.dot_dimension_numbers<[1], [1], [0], [0], [0, 0, 1, 0], [], []>} : vector<8x8xf32>, vector<8x8xf32>, vector<8x8xf32> -> vector<8x8xf32>
    %cst_36 = arith.constant -9.99999996E-13 : f32
    %49 = vector.broadcast %cst_36 : f32 to vector<8x8xf32>
    %50 = arith.select %24, %49, %48 : vector<8x8xi1>, vector<8x8xf32>
    %cst_37 = arith.constant dense<0xFF800000> : vector<8xf32>
    %51 = vector.multi_reduction <maximumf>, %50, %cst_37 [1] : vector<8x8xf32> to vector<8xf32>
    %52 = vector.shape_cast %51 : vector<8xf32> to vector<8x1xf32>
    %53 = vector.broadcast %52 : vector<8x1xf32> to vector<8x8xf32>
    %54 = arith.subf %50, %53 : vector<8x8xf32>
    %55 = math.exp %54 : vector<8x8xf32>
    %cst_38 = arith.constant dense<0.000000e+00> : vector<8xf32>
    %56 = vector.multi_reduction <add>, %55, %cst_38 [1] : vector<8x8xf32> to vector<8xf32>
    %57 = vector.shape_cast %56 : vector<8xf32> to vector<8x1xf32>
    %58 = tpu.reciprocal %57 {approx = true} : vector<8x1xf32> -> vector<8x1xf32>
    %59 = vector.broadcast %58 : vector<8x1xf32> to vector<8x8xf32>
    %60 = arith.mulf %55, %59 : vector<8x8xf32>
    %c0_39 = arith.constant 0 : index
    %c1 = arith.constant 1 : index
    %c0_40 = arith.constant 0 : index
    %c0_41 = arith.constant 0 : index
    %61 = vector.load %arg14[%c0_39, %c1, %c0_40, %c0_41] : memref<1x4x8x8xf32, #tpu.memory_space<vmem>>, vector<1x1x8x8xf32>
    %62 = vector.shape_cast %61 : vector<1x1x8x8xf32> to vector<8x8xf32>
    %63 = vector.shape_cast %60 : vector<8x8xf32> to vector<1x1x8x8xf32>
    tpu.vector_store %arg14[%c0_39, %c1, %c0_40, %c0_41], %63 {strides = array<i32>} : memref<1x4x8x8xf32, #tpu.memory_space<vmem>>, vector<1x1x8x8xf32>,
    %cst_42 = arith.constant dense<0.000000e+00> : vector<8x8xf32>
    %64 = tpu.matmul %60, %47, %cst_42 {dimension_numbers = #tpu.dot_dimension_numbers<[1], [0], [0], [1], [0, 0, 1, 1], [], []>} : vector<8x8xf32>, vector<8x8xf32>, vector<8x8xf32> -> vector<8x8xf32>
    %65 = vector.extract_strided_slice %10 {offsets = [0, 16], sizes = [8, 8], strides = [1, 1]} : vector<8x32xf32> to vector<8x8xf32>
    %66 = vector.extract_strided_slice %15 {offsets = [0, 16], sizes = [8, 8], strides = [1, 1]} : vector<8x32xf32> to vector<8x8xf32>
    %67 = vector.extract_strided_slice %20 {offsets = [0, 16], sizes = [8, 8], strides = [1, 1]} : vector<8x32xf32> to vector<8x8xf32>
    %cst_43 = arith.constant dense<0.000000e+00> : vector<8x8xf32>
    %68 = tpu.matmul %65, %66, %cst_43 {dimension_numbers = #tpu.dot_dimension_numbers<[1], [1], [0], [0], [0, 0, 1, 0], [], []>} : vector<8x8xf32>, vector<8x8xf32>, vector<8x8xf32> -> vector<8x8xf32>
    %cst_44 = arith.constant -9.99999996E-13 : f32
    %69 = vector.broadcast %cst_44 : f32 to vector<8x8xf32>
    %70 = arith.select %24, %69, %68 : vector<8x8xi1>, vector<8x8xf32>
    %cst_45 = arith.constant dense<0xFF800000> : vector<8xf32>
    %71 = vector.multi_reduction <maximumf>, %70, %cst_45 [1] : vector<8x8xf32> to vector<8xf32>
    %72 = vector.shape_cast %71 : vector<8xf32> to vector<8x1xf32>
    %73 = vector.broadcast %72 : vector<8x1xf32> to vector<8x8xf32>
    %74 = arith.subf %70, %73 : vector<8x8xf32>
    %75 = math.exp %74 : vector<8x8xf32>
    %cst_46 = arith.constant dense<0.000000e+00> : vector<8xf32>
    %76 = vector.multi_reduction <add>, %75, %cst_46 [1] : vector<8x8xf32> to vector<8xf32>
    %77 = vector.shape_cast %76 : vector<8xf32> to vector<8x1xf32>
    %78 = tpu.reciprocal %77 {approx = true} : vector<8x1xf32> -> vector<8x1xf32>
    %79 = vector.broadcast %78 : vector<8x1xf32> to vector<8x8xf32>
    %80 = arith.mulf %75, %79 : vector<8x8xf32>
    %c0_47 = arith.constant 0 : index
    %c2 = arith.constant 2 : index
    %c0_48 = arith.constant 0 : index
    %c0_49 = arith.constant 0 : index
    %81 = vector.load %arg14[%c0_47, %c2, %c0_48, %c0_49] : memref<1x4x8x8xf32, #tpu.memory_space<vmem>>, vector<1x1x8x8xf32>
    %82 = vector.shape_cast %81 : vector<1x1x8x8xf32> to vector<8x8xf32>
    %83 = vector.shape_cast %80 : vector<8x8xf32> to vector<1x1x8x8xf32>
    tpu.vector_store %arg14[%c0_47, %c2, %c0_48, %c0_49], %83 {strides = array<i32>} : memref<1x4x8x8xf32, #tpu.memory_space<vmem>>, vector<1x1x8x8xf32>,
    %cst_50 = arith.constant dense<0.000000e+00> : vector<8x8xf32>
    %84 = tpu.matmul %80, %67, %cst_50 {dimension_numbers = #tpu.dot_dimension_numbers<[1], [0], [0], [1], [0, 0, 1, 1], [], []>} : vector<8x8xf32>, vector<8x8xf32>, vector<8x8xf32> -> vector<8x8xf32>
    %85 = vector.extract_strided_slice %10 {offsets = [0, 24], sizes = [8, 8], strides = [1, 1]} : vector<8x32xf32> to vector<8x8xf32>
    %86 = vector.extract_strided_slice %15 {offsets = [0, 24], sizes = [8, 8], strides = [1, 1]} : vector<8x32xf32> to vector<8x8xf32>
    %87 = vector.extract_strided_slice %20 {offsets = [0, 24], sizes = [8, 8], strides = [1, 1]} : vector<8x32xf32> to vector<8x8xf32>
    %cst_51 = arith.constant dense<0.000000e+00> : vector<8x8xf32>
    %88 = tpu.matmul %85, %86, %cst_51 {dimension_numbers = #tpu.dot_dimension_numbers<[1], [1], [0], [0], [0, 0, 1, 0], [], []>} : vector<8x8xf32>, vector<8x8xf32>, vector<8x8xf32> -> vector<8x8xf32>
    %cst_52 = arith.constant -9.99999996E-13 : f32
    %89 = vector.broadcast %cst_52 : f32 to vector<8x8xf32>
    %90 = arith.select %24, %89, %88 : vector<8x8xi1>, vector<8x8xf32>
    %cst_53 = arith.constant dense<0xFF800000> : vector<8xf32>
    %91 = vector.multi_reduction <maximumf>, %90, %cst_53 [1] : vector<8x8xf32> to vector<8xf32>
    %92 = vector.shape_cast %91 : vector<8xf32> to vector<8x1xf32>
    %93 = vector.broadcast %92 : vector<8x1xf32> to vector<8x8xf32>
    %94 = arith.subf %90, %93 : vector<8x8xf32>
    %95 = math.exp %94 : vector<8x8xf32>
    %cst_54 = arith.constant dense<0.000000e+00> : vector<8xf32>
    %96 = vector.multi_reduction <add>, %95, %cst_54 [1] : vector<8x8xf32> to vector<8xf32>
    %97 = vector.shape_cast %96 : vector<8xf32> to vector<8x1xf32>
    %98 = tpu.reciprocal %97 {approx = true} : vector<8x1xf32> -> vector<8x1xf32>
    %99 = vector.broadcast %98 : vector<8x1xf32> to vector<8x8xf32>
    %100 = arith.mulf %95, %99 : vector<8x8xf32>
    %c0_55 = arith.constant 0 : index
    %c3 = arith.constant 3 : index
    %c0_56 = arith.constant 0 : index
    %c0_57 = arith.constant 0 : index
    %101 = vector.load %arg14[%c0_55, %c3, %c0_56, %c0_57] : memref<1x4x8x8xf32, #tpu.memory_space<vmem>>, vector<1x1x8x8xf32>
    %102 = vector.shape_cast %101 : vector<1x1x8x8xf32> to vector<8x8xf32>
    %103 = vector.shape_cast %100 : vector<8x8xf32> to vector<1x1x8x8xf32>
    tpu.vector_store %arg14[%c0_55, %c3, %c0_56, %c0_57], %103 {strides = array<i32>} : memref<1x4x8x8xf32, #tpu.memory_space<vmem>>, vector<1x1x8x8xf32>,
    %cst_58 = arith.constant dense<0.000000e+00> : vector<8x8xf32>
    %104 = tpu.matmul %100, %87, %cst_58 {dimension_numbers = #tpu.dot_dimension_numbers<[1], [0], [0], [1], [0, 0, 1, 1], [], []>} : vector<8x8xf32>, vector<8x8xf32>, vector<8x8xf32> -> vector<8x8xf32>
    %105 = tpu.concatenate %44, %64, %84, %104 in 1 : vector<8x8xf32>, vector<8x8xf32>, vector<8x8xf32>, vector<8x8xf32> -> vector<8x32xf32>
    %c0_59 = arith.constant 0 : index
    %c0_60 = arith.constant 0 : index
    %106 = vector.load %arg8[%c0_59, %c0_60] : memref<32x32xf32, #tpu.memory_space<vmem>>, vector<32x32xf32>
    %cst_61 = arith.constant dense<0.000000e+00> : vector<8x32xf32>
    %107 = tpu.matmul %105, %106, %cst_61 {dimension_numbers = #tpu.dot_dimension_numbers<[1], [0], [0], [1], [0, 0, 1, 1], [], []>} : vector<8x32xf32>, vector<32x32xf32>, vector<8x32xf32> -> vector<8x32xf32>
    %c0_62 = arith.constant 0 : index
    %c0_63 = arith.constant 0 : index
    %108 = vector.load %arg12[%c0_62, %c0_63] : memref<1x32xf32, #tpu.memory_space<vmem>>, vector<1x32xf32>
    %109 = vector.broadcast %108 : vector<1x32xf32> to vector<8x32xf32>
    %110 = arith.addf %107, %109 : vector<8x32xf32>
    %c0_64 = arith.constant 0 : index
    %c0_65 = arith.constant 0 : index
    %c0_66 = arith.constant 0 : index
    %111 = vector.load %arg13[%c0_64, %c0_65, %c0_66] : memref<1x8x32xf32, #tpu.memory_space<vmem>>, vector<1x8x32xf32>
    %112 = vector.shape_cast %111 : vector<1x8x32xf32> to vector<8x32xf32>
    %113 = vector.shape_cast %110 : vector<8x32xf32> to vector<1x8x32xf32>
    tpu.vector_store %arg13[%c0_64, %c0_65, %c0_66], %113 {strides = array<i32>} : memref<1x8x32xf32, #tpu.memory_space<vmem>>, vector<1x8x32xf32>,
    return
  }
  func.func @transform_0(%arg0: i32) -> (i32, i32, i32) {
    %c0_i32 = arith.constant 0 : i32
    %c0_i32_0 = arith.constant 0 : i32
    %c0_i32_1 = arith.constant 0 : i32
    return %arg0, %c0_i32, %c0_i32_0 : i32, i32, i32
  }
  func.func @transform_1(%arg0: i32) -> (i32, i32, i32) {
    %c0_i32 = arith.constant 0 : i32
    %c0_i32_0 = arith.constant 0 : i32
    %c0_i32_1 = arith.constant 0 : i32
    return %arg0, %c0_i32, %c0_i32_0 : i32, i32, i32
  }
  func.func @transform_2(%arg0: i32) -> (i32, i32, i32) {
    %c0_i32 = arith.constant 0 : i32
    %c0_i32_0 = arith.constant 0 : i32
    %c0_i32_1 = arith.constant 0 : i32
    return %arg0, %c0_i32, %c0_i32_0 : i32, i32, i32
  }
  func.func @transform_3(%arg0: i32) -> (i32, i32, i32, i32) {
    %c0_i32 = arith.constant 0 : i32
    %c0_i32_0 = arith.constant 0 : i32
    %c0_i32_1 = arith.constant 0 : i32
    %c0_i32_2 = arith.constant 0 : i32
    return %arg0, %c0_i32, %c0_i32_0, %c0_i32_1 : i32, i32, i32, i32
  }
  func.func @transform_4(%arg0: i32) -> (i32, i32) {
    %c0_i32 = arith.constant 0 : i32
    %c0_i32_0 = arith.constant 0 : i32
    %c0_i32_1 = arith.constant 0 : i32
    return %c0_i32, %c0_i32_0 : i32, i32
  }
  func.func @transform_5(%arg0: i32) -> (i32, i32) {
    %c0_i32 = arith.constant 0 : i32
    %c0_i32_0 = arith.constant 0 : i32
    %c0_i32_1 = arith.constant 0 : i32
    return %c0_i32, %c0_i32_0 : i32, i32
  }
  func.func @transform_6(%arg0: i32) -> (i32, i32) {
    %c0_i32 = arith.constant 0 : i32
    %c0_i32_0 = arith.constant 0 : i32
    %c0_i32_1 = arith.constant 0 : i32
    return %c0_i32, %c0_i32_0 : i32, i32
  }
  func.func @transform_7(%arg0: i32) -> (i32, i32) {
    %c0_i32 = arith.constant 0 : i32
    %c0_i32_0 = arith.constant 0 : i32
    %c0_i32_1 = arith.constant 0 : i32
    return %c0_i32, %c0_i32_0 : i32, i32
  }
  func.func @transform_8(%arg0: i32) -> (i32, i32) {
    %c0_i32 = arith.constant 0 : i32
    %c0_i32_0 = arith.constant 0 : i32
    %c0_i32_1 = arith.constant 0 : i32
    return %c0_i32, %c0_i32_0 : i32, i32
  }
  func.func @transform_9(%arg0: i32) -> (i32, i32) {
    %c0_i32 = arith.constant 0 : i32
    %c0_i32_0 = arith.constant 0 : i32
    %c0_i32_1 = arith.constant 0 : i32
    return %c0_i32, %c0_i32_0 : i32, i32
  }
  func.func @transform_10(%arg0: i32) -> (i32, i32) {
    %c0_i32 = arith.constant 0 : i32
    %c0_i32_0 = arith.constant 0 : i32
    %c0_i32_1 = arith.constant 0 : i32
    return %c0_i32, %c0_i32_0 : i32, i32
  }
  func.func @transform_11(%arg0: i32) -> (i32, i32) {
    %c0_i32 = arith.constant 0 : i32
    %c0_i32_0 = arith.constant 0 : i32
    %c0_i32_1 = arith.constant 0 : i32
    return %c0_i32, %c0_i32_0 : i32, i32
  }
  func.func @transform_12(%arg0: i32) -> (i32, i32, i32) {
    %c0_i32 = arith.constant 0 : i32
    %c0_i32_0 = arith.constant 0 : i32
    %c0_i32_1 = arith.constant 0 : i32
    return %arg0, %c0_i32, %c0_i32_0 : i32, i32, i32
  }
  func.func @transform_13(%arg0: i32) -> (i32, i32, i32, i32) {
    %c0_i32 = arith.constant 0 : i32
    %c0_i32_0 = arith.constant 0 : i32
    %c0_i32_1 = arith.constant 0 : i32
    %c0_i32_2 = arith.constant 0 : i32
    return %arg0, %c0_i32, %c0_i32_0, %c0_i32_1 : i32, i32, i32, i32
  }
}

</mosaic_0001>

<llo_original>
// kernel: tpu_custom_call.1
$region0: #{tpu_custom_call.1}
  #allocation0 [shape = 'u32[]', space=smem, size = 0x4, offset = 0x4, fixed_abs, tag = 'smem constant byte address 0x4 - core index']
  #allocation1 [shape = 'u32[72,128]{1,0:T(1,128)}', space=vmem, size = 0x9000, scoped, tag = 'internal scratch']
  %s0 = inlined_call_operand.hbm [shape: f32[2,8,32], index: 0, kind: input, shape index: {}]
  %s1 = inlined_call_operand.hbm [shape: f32[2,8,32], index: 1, kind: input, shape index: {}]
  %s2 = inlined_call_operand.hbm [shape: f32[2,8,32], index: 2, kind: input, shape index: {}]
  %s3 = inlined_call_operand.hbm [shape: s32[2,1,8,8], index: 3, kind: input, shape index: {}]
  %s4 = inlined_call_operand.hbm [shape: f32[32,32], index: 4, kind: input, shape index: {}]
  %s5 = inlined_call_operand.hbm [shape: f32[32,32], index: 5, kind: input, shape index: {}]
  %s6 = inlined_call_operand.hbm [shape: f32[32,32], index: 6, kind: input, shape index: {}]
  %s7 = inlined_call_operand.hbm [shape: f32[32,32], index: 7, kind: input, shape index: {}]
  %s8 = inlined_call_operand.vmem [shape: f32[1,32], index: 8, kind: input, shape index: {}]
  %s9 = inlined_call_operand.vmem [shape: f32[1,32], index: 9, kind: input, shape index: {}]
  %s10 = inlined_call_operand.vmem [shape: f32[1,32], index: 10, kind: input, shape index: {}]
  %s11 = inlined_call_operand.vmem [shape: f32[1,32], index: 11, kind: input, shape index: {}]
  %s12 = inlined_call_operand.hbm [shape: f32[2,8,32], index: 12, kind: output, shape index: {0}]
  %s13 = inlined_call_operand.hbm [shape: f32[2,4,8,8], index: 13, kind: output, shape index: {1}]
  %14 = xla_tuple %s12, %s13
  %s15 = sld [smem:[#allocation0]]
  $region121: #{tpu_custom_call.1} parent=0
    _
  %s17 = ssub.s32 1, %s15
  %s18 = scalar_select 0, %s17, %s15
  $region1: #{tpu_custom_call.1} parent=0
    #allocation2 [shape = 'u8[8192]{0}', space=vmem, size = 0x2000, scoped, tag = 'input window, operand 0']
    #allocation3 [shape = 's32[2]{0}', space=sflag, size = 0x8, scoped, tag = 'scoped memory for tpu_custom_call.1']
    #allocation4 [shape = 's32[2]{0}', space=sflag, size = 0x8, scoped, tag = 'scoped memory for tpu_custom_call.1']
    #allocation5 [shape = 'u8[8192]{0}', space=vmem, size = 0x2000, scoped, tag = 'input window, operand 1']
    #allocation6 [shape = 's32[2]{0}', space=sflag, size = 0x8, scoped, tag = 'scoped memory for tpu_custom_call.1']
    #allocation7 [shape = 'u8[8192]{0}', space=vmem, size = 0x2000, scoped, tag = 'input window, operand 2']
    #allocation8 [shape = 'u8[8192]{0}', space=vmem, size = 0x2000, scoped, tag = 'input window, operand 3']
    #allocation9 [shape = 's32[2]{0}', space=sflag, size = 0x8, scoped, tag = 'scoped memory for tpu_custom_call.1']
    #allocation10 [shape = 'u8[16384]{0}', space=vmem, size = 0x4000, scoped, tag = 'input window, operand 4, single buffered']
    #allocation11 [shape = 'u8[16384]{0}', space=vmem, size = 0x4000, scoped, tag = 'input window, operand 5, single buffered']
    #allocation12 [shape = 's32[1]{0}', space=sflag, size = 0x4, scoped, tag = 'scoped memory for tpu_custom_call.1']
    #allocation13 [shape = 'u8[16384]{0}', space=vmem, size = 0x4000, scoped, tag = 'input window, operand 6, single buffered']
    #allocation14 [shape = 'u8[16384]{0}', space=vmem, size = 0x4000, scoped, tag = 'input window, operand 7, single buffered']
    #allocation15 [shape = 's32[1]{0}', space=sflag, size = 0x4, scoped, tag = 'scoped memory for tpu_custom_call.1']
    #allocation16 [shape = 'u8[8192]{0}', space=vmem, size = 0x2000, scoped, tag = 'output window, operand 0']
    #allocation17 [shape = 'u8[32768]{0}', space=vmem, size = 0x8000, scoped, tag = 'output window, operand 1']
    #allocation18 [shape = 's32[2]{0}', space=sflag, size = 0x8, scoped, tag = 'scoped memory for tpu_custom_call.1']
    %19 = vsyncpa [#allocation3], 0
    %s20 = scalar_lea.sflag [#allocation3], 1
    %21 = vsyncpa %s20, 0
    %22 = vsyncpa [#allocation6], 0
    %s23 = scalar_lea.sflag [#allocation6], 1
    %24 = vsyncpa %s23, 0
    %25 = vsyncpa [#allocation9], 0
    %s26 = scalar_lea.sflag [#allocation9], 1
    %27 = vsyncpa %s26, 0
    %28 = vsyncpa [#allocation12], 0
    %29 = vsyncpa [#allocation15], 0
    %30 = vsyncpa [#allocation4], 0
    %s31 = scalar_lea.sflag [#allocation4], 1
    %32 = vsyncpa %s31, 0
    %33 = vsyncpa [#allocation18], 0
    %s34 = scalar_lea.sflag [#allocation18], 1
    %35 = vsyncpa %s34, 0
    loop: start=0, step=1, limit=4
    $region2: #{tpu_custom_call.1} parent=1 // loop_pre_header
      _
    $region3: #{tpu_custom_call.1} parent=1 // loop_header
      %s37 = sphi 0, %s41
      %p38 = scmp.ge.s32.totalorder %s37, 4
      %s47 = sphi 0, %s49
      %s50 = sphi 0, %s47
      %s51 = sphi 0, %s50
      %s67 = sphi 0, %s51
      %s73 = sphi 0, %s75
      %s76 = sphi 0, %s73
      %s77 = sphi 0, %s76
      %s93 = sphi 0, %s77
      %s99 = sphi 0, %s101
      %s102 = sphi 0, %s99
      %s103 = sphi 0, %s102
      %s119 = sphi 0, %s103
      %s125 = sphi 0, %s127
      %s128 = sphi 0, %s125
      %s129 = sphi 0, %s128
      %s145 = sphi 0, %s129
      %s149 = sphi 0, %s149
      %s151 = sphi 0, %s149
      %s152 = sphi 0, %s151
      %s166 = sphi 0, %s152
      %s170 = sphi 0, %s170
      %s172 = sphi 0, %s170
      %s173 = sphi 0, %s172
      %s187 = sphi 0, %s173
      %s191 = sphi 0, %s191
      %s193 = sphi 0, %s191
      %s194 = sphi 0, %s193
      %s208 = sphi 0, %s194
      %s212 = sphi 0, %s212
      %s214 = sphi 0, %s212
      %s215 = sphi 0, %s214
      %s229 = sphi 0, %s215
      %s233 = sphi 0, %s233
      %s235 = sphi 0, %s233
      %s236 = sphi 0, %s235
      %s250 = sphi 0, %s236
      %s254 = sphi 0, %s254
      %s256 = sphi 0, %s254
      %s257 = sphi 0, %s256
      %s271 = sphi 0, %s257
      %s275 = sphi 0, %s275
      %s277 = sphi 0, %s275
      %s278 = sphi 0, %s277
      %s292 = sphi 0, %s278
      %s296 = sphi 0, %s296
      %s298 = sphi 0, %s296
      %s299 = sphi 0, %s298
      %s313 = sphi 0, %s299
      %s319 = sphi 0, %s321
      %s322 = sphi 0, %s319
      %s323 = sphi 0, %s322
      %s339 = sphi 0, %s323
      %s345 = sphi 0, %s347
      %s348 = sphi 0, %s345
      %s349 = sphi 0, %s348
      %s365 = sphi 0, %s349
    $region4: #{tpu_custom_call.1} parent=1 // loop_header_branch
      %40 = sbr.rel (%p38) target = $region8
    $region5: #{tpu_custom_call.1} parent=1 // loop_body
      %s42 = ssub.s32 %s37, 1
      %s43 = ssub.s32 %s37, 2
      %s44 = sadd.s32 %s37, 1
      %s45 = ssub.s32 %s37, %s44
      %p46 = scmp.eq.s32.totalorder %s45, 0
      %s48 = sadd.s32 %s47, 1
      %s49 = scalar_select %p46, %s47, %s48
      %p52 = pneg %p46
      %p53 = scmp.eq.s32.totalorder %s37, 1
      %p54 = por %p52, %p53
      %p55 = scmp.ne.s32.totalorder %s47, %s50
      %p56 = scmp.eq.s32.totalorder %s37, 0
      %p57 = por %p55, %p56
      %p58 = scmp.ne.s32.totalorder %s47, %s50
      %p59 = scmp.eq.s32.totalorder %s42, 1
      %p60 = por %p58, %p59
      %p61 = scmp.ne.s32.totalorder %s50, %s51
      %p62 = scmp.eq.s32.totalorder %s42, 0
      %p63 = por %p61, %p62
      %p64 = scmp.ne.s32.totalorder %s50, %s51
      %p65 = scmp.eq.s32.totalorder %s43, 1
      %p66 = por %p64, %p65
      %p68 = scmp.ne.s32.totalorder %s51, %s67
      %p69 = scmp.eq.s32.totalorder %s43, 0
      %p70 = por %p68, %p69
      %s71 = ssub.s32 %s37, %s44
      %p72 = scmp.eq.s32.totalorder %s71, 0
      %s74 = sadd.s32 %s73, 1
      %s75 = scalar_select %p72, %s73, %s74
      %p78 = pneg %p72
      %p79 = scmp.eq.s32.totalorder %s37, 1
      %p80 = por %p78, %p79
      %p81 = scmp.ne.s32.totalorder %s73, %s76
      %p82 = scmp.eq.s32.totalorder %s37, 0
      %p83 = por %p81, %p82
      %p84 = scmp.ne.s32.totalorder %s73, %s76
      %p85 = scmp.eq.s32.totalorder %s42, 1
      %p86 = por %p84, %p85
      %p87 = scmp.ne.s32.totalorder %s76, %s77
      %p88 = scmp.eq.s32.totalorder %s42, 0
      %p89 = por %p87, %p88
      %p90 = scmp.ne.s32.totalorder %s76, %s77
      %p91 = scmp.eq.s32.totalorder %s43, 1
      %p92 = por %p90, %p91
      %p94 = scmp.ne.s32.totalorder %s77, %s93
      %p95 = scmp.eq.s32.totalorder %s43, 0
      %p96 = por %p94, %p95
      %s97 = ssub.s32 %s37, %s44
      %p98 = scmp.eq.s32.totalorder %s97, 0
      %s100 = sadd.s32 %s99, 1
      %s101 = scalar_select %p98, %s99, %s100
      %p104 = pneg %p98
      %p105 = scmp.eq.s32.totalorder %s37, 1
      %p106 = por %p104, %p105
      %p107 = scmp.ne.s32.totalorder %s99, %s102
      %p108 = scmp.eq.s32.totalorder %s37, 0
      %p109 = por %p107, %p108
      %p110 = scmp.ne.s32.totalorder %s99, %s102
      %p111 = scmp.eq.s32.totalorder %s42, 1
      %p112 = por %p110, %p111
      %p113 = scmp.ne.s32.totalorder %s102, %s103
      %p114 = scmp.eq.s32.totalorder %s42, 0
      %p115 = por %p113, %p114
      %p116 = scmp.ne.s32.totalorder %s102, %s103
      %p117 = scmp.eq.s32.totalorder %s43, 1
      %p118 = por %p116, %p117
      %p120 = scmp.ne.s32.totalorder %s103, %s119
      %p121 = scmp.eq.s32.totalorder %s43, 0
      %p122 = por %p120, %p121
      %s123 = ssub.s32 %s37, %s44
      %p124 = scmp.eq.s32.totalorder %s123, 0
      %s126 = sadd.s32 %s125, 1
      %s127 = scalar_select %p124, %s125, %s126
      %p130 = pneg %p124
      %p131 = scmp.eq.s32.totalorder %s37, 1
      %p132 = por %p130, %p131
      %p133 = scmp.ne.s32.totalorder %s125, %s128
      %p134 = scmp.eq.s32.totalorder %s37, 0
      %p135 = por %p133, %p134
      %p136 = scmp.ne.s32.totalorder %s125, %s128
      %p137 = scmp.eq.s32.totalorder %s42, 1
      %p138 = por %p136, %p137
      %p139 = scmp.ne.s32.totalorder %s128, %s129
      %p140 = scmp.eq.s32.totalorder %s42, 0
      %p141 = por %p139, %p140
      %p142 = scmp.ne.s32.totalorder %s128, %s129
      %p143 = scmp.eq.s32.totalorder %s43, 1
      %p144 = por %p142, %p143
      %p146 = scmp.ne.s32.totalorder %s129, %s145
      %p147 = scmp.eq.s32.totalorder %s43, 0
      %p148 = por %p146, %p147
      %s150 = sadd.s32 %s149, 1
      %p153 = scmp.eq.s32.totalorder %s37, 1
      %p154 = scmp.ne.s32.totalorder %s149, %s151
      %p155 = scmp.eq.s32.totalorder %s37, 0
      %p156 = por %p154, %p155
      %p157 = scmp.ne.s32.totalorder %s149, %s151
      %p158 = scmp.eq.s32.totalorder %s42, 1
      %p159 = por %p157, %p158
      %p160 = scmp.ne.s32.totalorder %s151, %s152
      %p161 = scmp.eq.s32.totalorder %s42, 0
      %p162 = por %p160, %p161
      %p163 = scmp.ne.s32.totalorder %s151, %s152
      %p164 = scmp.eq.s32.totalorder %s43, 1
      %p165 = por %p163, %p164
      %p167 = scmp.ne.s32.totalorder %s152, %s166
      %p168 = scmp.eq.s32.totalorder %s43, 0
      %p169 = por %p167, %p168
      %s171 = sadd.s32 %s170, 1
      %p174 = scmp.eq.s32.totalorder %s37, 1
      %p175 = scmp.ne.s32.totalorder %s170, %s172
      %p176 = scmp.eq.s32.totalorder %s37, 0
      %p177 = por %p175, %p176
      %p178 = scmp.ne.s32.totalorder %s170, %s172
      %p179 = scmp.eq.s32.totalorder %s42, 1
      %p180 = por %p178, %p179
      %p181 = scmp.ne.s32.totalorder %s172, %s173
      %p182 = scmp.eq.s32.totalorder %s42, 0
      %p183 = por %p181, %p182
      %p184 = scmp.ne.s32.totalorder %s172, %s173
      %p185 = scmp.eq.s32.totalorder %s43, 1
      %p186 = por %p184, %p185
      %p188 = scmp.ne.s32.totalorder %s173, %s187
      %p189 = scmp.eq.s32.totalorder %s43, 0
      %p190 = por %p188, %p189
      %s192 = sadd.s32 %s191, 1
      %p195 = scmp.eq.s32.totalorder %s37, 1
      %p196 = scmp.ne.s32.totalorder %s191, %s193
      %p197 = scmp.eq.s32.totalorder %s37, 0
      %p198 = por %p196, %p197
      %p199 = scmp.ne.s32.totalorder %s191, %s193
      %p200 = scmp.eq.s32.totalorder %s42, 1
      %p201 = por %p199, %p200
      %p202 = scmp.ne.s32.totalorder %s193, %s194
      %p203 = scmp.eq.s32.totalorder %s42, 0
      %p204 = por %p202, %p203
      %p205 = scmp.ne.s32.totalorder %s193, %s194
      %p206 = scmp.eq.s32.totalorder %s43, 1
      %p207 = por %p205, %p206
      %p209 = scmp.ne.s32.totalorder %s194, %s208
      %p210 = scmp.eq.s32.totalorder %s43, 0
      %p211 = por %p209, %p210
      %s213 = sadd.s32 %s212, 1
      %p216 = scmp.eq.s32.totalorder %s37, 1
      %p217 = scmp.ne.s32.totalorder %s212, %s214
      %p218 = scmp.eq.s32.totalorder %s37, 0
      %p219 = por %p217, %p218
      %p220 = scmp.ne.s32.totalorder %s212, %s214
      %p221 = scmp.eq.s32.totalorder %s42, 1
      %p222 = por %p220, %p221
      %p223 = scmp.ne.s32.totalorder %s214, %s215
      %p224 = scmp.eq.s32.totalorder %s42, 0
      %p225 = por %p223, %p224
      %p226 = scmp.ne.s32.totalorder %s214, %s215
      %p227 = scmp.eq.s32.totalorder %s43, 1
      %p228 = por %p226, %p227
      %p230 = scmp.ne.s32.totalorder %s215, %s229
      %p231 = scmp.eq.s32.totalorder %s43, 0
      %p232 = por %p230, %p231
      %s234 = sadd.s32 %s233, 1
      %p237 = scmp.eq.s32.totalorder %s37, 1
      %p238 = scmp.ne.s32.totalorder %s233, %s235
      %p239 = scmp.eq.s32.totalorder %s37, 0
      %p240 = por %p238, %p239
      %p241 = scmp.ne.s32.totalorder %s233, %s235
      %p242 = scmp.eq.s32.totalorder %s42, 1
      %p243 = por %p241, %p242
      %p244 = scmp.ne.s32.totalorder %s235, %s236
      %p245 = scmp.eq.s32.totalorder %s42, 0
      %p246 = por %p244, %p245
      %p247 = scmp.ne.s32.totalorder %s235, %s236
      %p248 = scmp.eq.s32.totalorder %s43, 1
      %p249 = por %p247, %p248
      %p251 = scmp.ne.s32.totalorder %s236, %s250
      %p252 = scmp.eq.s32.totalorder %s43, 0
      %p253 = por %p251, %p252
      %s255 = sadd.s32 %s254, 1
      %p258 = scmp.eq.s32.totalorder %s37, 1
      %p259 = scmp.ne.s32.totalorder %s254, %s256
      %p260 = scmp.eq.s32.totalorder %s37, 0
      %p261 = por %p259, %p260
      %p262 = scmp.ne.s32.totalorder %s254, %s256
      %p263 = scmp.eq.s32.totalorder %s42, 1
      %p264 = por %p262, %p263
      %p265 = scmp.ne.s32.totalorder %s256, %s257
      %p266 = scmp.eq.s32.totalorder %s42, 0
      %p267 = por %p265, %p266
      %p268 = scmp.ne.s32.totalorder %s256, %s257
      %p269 = scmp.eq.s32.totalorder %s43, 1
      %p270 = por %p268, %p269
      %p272 = scmp.ne.s32.totalorder %s257, %s271
      %p273 = scmp.eq.s32.totalorder %s43, 0
      %p274 = por %p272, %p273
      %s276 = sadd.s32 %s275, 1
      %p279 = scmp.eq.s32.totalorder %s37, 1
      %p280 = scmp.ne.s32.totalorder %s275, %s277
      %p281 = scmp.eq.s32.totalorder %s37, 0
      %p282 = por %p280, %p281
      %p283 = scmp.ne.s32.totalorder %s275, %s277
      %p284 = scmp.eq.s32.totalorder %s42, 1
      %p285 = por %p283, %p284
      %p286 = scmp.ne.s32.totalorder %s277, %s278
      %p287 = scmp.eq.s32.totalorder %s42, 0
      %p288 = por %p286, %p287
      %p289 = scmp.ne.s32.totalorder %s277, %s278
      %p290 = scmp.eq.s32.totalorder %s43, 1
      %p291 = por %p289, %p290
      %p293 = scmp.ne.s32.totalorder %s278, %s292
      %p294 = scmp.eq.s32.totalorder %s43, 0
      %p295 = por %p293, %p294
      %s297 = sadd.s32 %s296, 1
      %p300 = scmp.eq.s32.totalorder %s37, 1
      %p301 = scmp.ne.s32.totalorder %s296, %s298
      %p302 = scmp.eq.s32.totalorder %s37, 0
      %p303 = por %p301, %p302
      %p304 = scmp.ne.s32.totalorder %s296, %s298
      %p305 = scmp.eq.s32.totalorder %s42, 1
      %p306 = por %p304, %p305
      %p307 = scmp.ne.s32.totalorder %s298, %s299
      %p308 = scmp.eq.s32.totalorder %s42, 0
      %p309 = por %p307, %p308
      %p310 = scmp.ne.s32.totalorder %s298, %s299
      %p311 = scmp.eq.s32.totalorder %s43, 1
      %p312 = por %p310, %p311
      %p314 = scmp.ne.s32.totalorder %s299, %s313
      %p315 = scmp.eq.s32.totalorder %s43, 0
      %p316 = por %p314, %p315
      %s317 = ssub.s32 %s37, %s44
      %p318 = scmp.eq.s32.totalorder %s317, 0
      %s320 = sadd.s32 %s319, 1
      %s321 = scalar_select %p318, %s319, %s320
      %p324 = pneg %p318
      %p325 = scmp.eq.s32.totalorder %s37, 1
      %p326 = por %p324, %p325
      %p327 = scmp.ne.s32.totalorder %s319, %s322
      %p328 = scmp.eq.s32.totalorder %s37, 0
      %p329 = por %p327, %p328
      %p330 = scmp.ne.s32.totalorder %s319, %s322
      %p331 = scmp.eq.s32.totalorder %s42, 1
      %p332 = por %p330, %p331
      %p333 = scmp.ne.s32.totalorder %s322, %s323
      %p334 = scmp.eq.s32.totalorder %s42, 0
      %p335 = por %p333, %p334
      %p336 = scmp.ne.s32.totalorder %s322, %s323
      %p337 = scmp.eq.s32.totalorder %s43, 1
      %p338 = por %p336, %p337
      %p340 = scmp.ne.s32.totalorder %s323, %s339
      %p341 = scmp.eq.s32.totalorder %s43, 0
      %p342 = por %p340, %p341
      %s343 = ssub.s32 %s37, %s44
      %p344 = scmp.eq.s32.totalorder %s343, 0
      %s346 = sadd.s32 %s345, 1
      %s347 = scalar_select %p344, %s345, %s346
      %p350 = pneg %p344
      %p351 = scmp.eq.s32.totalorder %s37, 1
      %p352 = por %p350, %p351
      %p353 = scmp.ne.s32.totalorder %s345, %s348
      %p354 = scmp.eq.s32.totalorder %s37, 0
      %p355 = por %p353, %p354
      %p356 = scmp.ne.s32.totalorder %s345, %s348
      %p357 = scmp.eq.s32.totalorder %s42, 1
      %p358 = por %p356, %p357
      %p359 = scmp.ne.s32.totalorder %s348, %s349
      %p360 = scmp.eq.s32.totalorder %s42, 0
      %p361 = por %p359, %p360
      %p362 = scmp.ne.s32.totalorder %s348, %s349
      %p363 = scmp.eq.s32.totalorder %s43, 1
      %p364 = por %p362, %p363
      %p366 = scmp.ne.s32.totalorder %s349, %s365
      %p367 = scmp.eq.s32.totalorder %s43, 0
      %p368 = por %p366, %p367
      %p369 = scmp.le.s32.totalorder 1, %s37
      %p370 = scmp.lt.s32.totalorder %s37, 3
      %p371 = pnand %p369, %p370
      %p372 = pneg %p371
      // Predicated region
      $region9: #{tpu_custom_call.1} parent=5 // pred_check
        _
      $region10: #{tpu_custom_call.1} parent=5 // pred_check_branch
        %374 = sbr.rel (%p371) target = $region12
      $region11: #{tpu_custom_call.1} parent=5 // pred_region
        %s375 = ssub.s32 %s37, 1
        // Predicated region
        $region13: #{tpu_custom_call.1} parent=11 // pred_check
          %p376 = pneg %p162
        $region14: #{tpu_custom_call.1} parent=11 // pred_check_branch
          %378 = sbr.rel (%p376) target = $region16
        $region15: #{tpu_custom_call.1} parent=11 // pred_region
          %380 = vsyncadd [#allocation9], 0
          %s381 = sshll.u32 %s4, 4
          %s382 = int_to_ptr.hbm [resolvable:$true] %s381
          %s383 = sshll.u32 [#allocation10], 4
          %s384 = int_to_ptr.vmem [resolvable:$true] %s383
          %389 = dma.hbm_to_vmem [thread:$0]  %s382, 512, %s384, [#allocation9], 128, 128, 8
        $region16: #{tpu_custom_call.1} parent=11 // pred_fallthru
          _
        // Predicated region
        $region17: #{tpu_custom_call.1} parent=11 // pred_check
          %p390 = pneg %p183
        $region18: #{tpu_custom_call.1} parent=11 // pred_check_branch
          %392 = sbr.rel (%p390) target = $region20
        $region19: #{tpu_custom_call.1} parent=11 // pred_region
          %394 = vsyncadd [#allocation12], 0
          %s395 = sshll.u32 %s5, 4
          %s396 = int_to_ptr.hbm [resolvable:$true] %s395
          %s397 = sshll.u32 [#allocation11], 4
          %s398 = int_to_ptr.vmem [resolvable:$true] %s397
          %403 = dma.hbm_to_vmem [thread:$0]  %s396, 512, %s398, [#allocation12], 128, 128, 8
        $region20: #{tpu_custom_call.1} parent=11 // pred_fallthru
          _
        // Predicated region
        $region21: #{tpu_custom_call.1} parent=11 // pred_check
          %p404 = pneg %p204
        $region22: #{tpu_custom_call.1} parent=11 // pred_check_branch
          %406 = sbr.rel (%p404) target = $region24
        $region23: #{tpu_custom_call.1} parent=11 // pred_region
          %408 = vsyncadd [#allocation12], 0
          %s409 = sshll.u32 %s6, 4
          %s410 = int_to_ptr.hbm [resolvable:$true] %s409
          %s411 = sshll.u32 [#allocation13], 4
          %s412 = int_to_ptr.vmem [resolvable:$true] %s411
          %417 = dma.hbm_to_vmem [thread:$0]  %s410, 512, %s412, [#allocation12], 128, 128, 8
        $region24: #{tpu_custom_call.1} parent=11 // pred_fallthru
          _
        // Predicated region
        $region25: #{tpu_custom_call.1} parent=11 // pred_check
          %p418 = pneg %p225
        $region26: #{tpu_custom_call.1} parent=11 // pred_check_branch
          %420 = sbr.rel (%p418) target = $region28
        $region27: #{tpu_custom_call.1} parent=11 // pred_region
          %422 = vsyncadd [#allocation15], 0
          %s423 = sshll.u32 %s7, 4
          %s424 = int_to_ptr.hbm [resolvable:$true] %s423
          %s425 = sshll.u32 [#allocation14], 4
          %s426 = int_to_ptr.vmem [resolvable:$true] %s425
          %431 = dma.hbm_to_vmem [thread:$0]  %s424, 512, %s426, [#allocation15], 128, 128, 8
        $region28: #{tpu_custom_call.1} parent=11 // pred_fallthru
          _
        // Predicated region
        $region29: #{tpu_custom_call.1} parent=11 // pred_check
          %p432 = pneg %p246
        $region30: #{tpu_custom_call.1} parent=11 // pred_check_branch
          %434 = sbr.rel (%p432) target = $region32
        $region31: #{tpu_custom_call.1} parent=11 // pred_region
          _
        $region32: #{tpu_custom_call.1} parent=11 // pred_fallthru
          _
        // Predicated region
        $region33: #{tpu_custom_call.1} parent=11 // pred_check
          %p435 = pneg %p267
        $region34: #{tpu_custom_call.1} parent=11 // pred_check_branch
          %437 = sbr.rel (%p435) target = $region36
        $region35: #{tpu_custom_call.1} parent=11 // pred_region
          _
        $region36: #{tpu_custom_call.1} parent=11 // pred_fallthru
          _
        // Predicated region
        $region37: #{tpu_custom_call.1} parent=11 // pred_check
          %p438 = pneg %p288
        $region38: #{tpu_custom_call.1} parent=11 // pred_check_branch
          %440 = sbr.rel (%p438) target = $region40
        $region39: #{tpu_custom_call.1} parent=11 // pred_region
          _
        $region40: #{tpu_custom_call.1} parent=11 // pred_fallthru
          _
        // Predicated region
        $region41: #{tpu_custom_call.1} parent=11 // pred_check
          %p441 = pneg %p309
        $region42: #{tpu_custom_call.1} parent=11 // pred_check_branch
          %443 = sbr.rel (%p441) target = $region44
        $region43: #{tpu_custom_call.1} parent=11 // pred_region
          _
        $region44: #{tpu_custom_call.1} parent=11 // pred_fallthru
          _
      $region12: #{tpu_custom_call.1} parent=5 // pred_fallthru
        _
      %p444 = scmp.lt.s32.totalorder %s37, 2
      // Predicated region
      $region45: #{tpu_custom_call.1} parent=5 // pred_check
        %p445 = pneg %p444
      $region46: #{tpu_custom_call.1} parent=5 // pred_check_branch
        %447 = sbr.rel (%p445) target = $region48
      $region47: #{tpu_custom_call.1} parent=5 // pred_region
        // Predicated region
        $region49: #{tpu_custom_call.1} parent=47 // pred_check
          %p448 = pneg %p57
        $region50: #{tpu_custom_call.1} parent=47 // pred_check_branch
          %450 = sbr.rel (%p448) target = $region52
        $region51: #{tpu_custom_call.1} parent=47 // pred_region
          %s451 = sand.u32 %s47, 1
          %s452 = scalar_lea.sflag [#allocation3], %s451
          %s453 = sand.u32 %s47, 1
          %s454 = smul.addr %s453, 8
          %s455 = scalar_lea.vmem [#allocation2], %s454
          %457 = vsyncadd %s452, 0
          %s458 = smul.addr %s37, 8
          %s459 = scalar_lea.hbm %s0, %s458
          %s461 = sshll.u32 %s459, 4
          %s462 = int_to_ptr.hbm [resolvable:$true] %s461
          %s463 = sshll.u32 %s455, 4
          %s464 = int_to_ptr.vmem [resolvable:$true] %s463
          %466 = dma.hbm_to_vmem [thread:$0]  %s462, 128, %s464, %s452
        $region52: #{tpu_custom_call.1} parent=47 // pred_fallthru
          _
        // Predicated region
        $region53: #{tpu_custom_call.1} parent=47 // pred_check
          %p467 = pneg %p83
        $region54: #{tpu_custom_call.1} parent=47 // pred_check_branch
          %469 = sbr.rel (%p467) target = $region56
        $region55: #{tpu_custom_call.1} parent=47 // pred_region
          %s470 = sand.u32 %s37, 1
          %s471 = scalar_lea.sflag [#allocation6], %s470
          %s472 = sand.u32 %s73, 1
          %s473 = smul.addr %s472, 8
          %s474 = scalar_lea.vmem [#allocation5], %s473
          %476 = vsyncadd %s471, 0
          %s477 = smul.addr %s37, 8
          %s478 = scalar_lea.hbm %s1, %s477
          %s480 = sshll.u32 %s478, 4
          %s481 = int_to_ptr.hbm [resolvable:$true] %s480
          %s482 = sshll.u32 %s474, 4
          %s483 = int_to_ptr.vmem [resolvable:$true] %s482
          %485 = dma.hbm_to_vmem [thread:$0]  %s481, 128, %s483, %s471
        $region56: #{tpu_custom_call.1} parent=47 // pred_fallthru
          _
        // Predicated region
        $region57: #{tpu_custom_call.1} parent=47 // pred_check
          %p486 = pneg %p109
        $region58: #{tpu_custom_call.1} parent=47 // pred_check_branch
          %488 = sbr.rel (%p486) target = $region60
        $region59: #{tpu_custom_call.1} parent=47 // pred_region
          %s489 = sand.u32 %s37, 1
          %s490 = scalar_lea.sflag [#allocation6], %s489
          %s491 = sand.u32 %s99, 1
          %s492 = smul.addr %s491, 8
          %s493 = scalar_lea.vmem [#allocation7], %s492
          %495 = vsyncadd %s490, 0
          %s496 = smul.addr %s37, 8
          %s497 = scalar_lea.hbm %s2, %s496
          %s499 = sshll.u32 %s497, 4
          %s500 = int_to_ptr.hbm [resolvable:$true] %s499
          %s501 = sshll.u32 %s493, 4
          %s502 = int_to_ptr.vmem [resolvable:$true] %s501
          %504 = dma.hbm_to_vmem [thread:$0]  %s500, 128, %s502, %s490
        $region60: #{tpu_custom_call.1} parent=47 // pred_fallthru
          _
        // Predicated region
        $region61: #{tpu_custom_call.1} parent=47 // pred_check
          %p505 = pneg %p135
        $region62: #{tpu_custom_call.1} parent=47 // pred_check_branch
          %507 = sbr.rel (%p505) target = $region64
        $region63: #{tpu_custom_call.1} parent=47 // pred_region
          %s508 = sand.u32 %s37, 1
          %s509 = scalar_lea.sflag [#allocation9], %s508
          %s510 = sand.u32 %s125, 1
          %s511 = smul.addr %s510, 8
          %s512 = scalar_lea.vmem [#allocation8], %s511
          %514 = vsyncadd %s509, 0
          %s515 = smul.addr %s37, 8
          %s516 = scalar_lea.hbm %s3, %s515
          %s518 = sshll.u32 %s516, 4
          %s519 = int_to_ptr.hbm [resolvable:$true] %s518
          %s520 = sshll.u32 %s512, 4
          %s521 = int_to_ptr.vmem [resolvable:$true] %s520
          %523 = dma.hbm_to_vmem [thread:$0]  %s519, 128, %s521, %s509
        $region64: #{tpu_custom_call.1} parent=47 // pred_fallthru
          _
      $region48: #{tpu_custom_call.1} parent=5 // pred_fallthru
        _
      %p524 = scmp.le.s32.totalorder 1, %s37
      %p525 = scmp.lt.s32.totalorder %s37, 3
      %p526 = pnand %p524, %p525
      %p527 = pneg %p526
      // Predicated region
      $region65: #{tpu_custom_call.1} parent=5 // pred_check
        _
      $region66: #{tpu_custom_call.1} parent=5 // pred_check_branch
        %529 = sbr.rel (%p526) target = $region68
      $region67: #{tpu_custom_call.1} parent=5 // pred_region
        %s530 = ssub.s32 %s37, 1
        %s531 = sand.u32 %s50, 1
        %s532 = scalar_lea.sflag [#allocation3], %s531
        %s533 = sand.u32 %s50, 1
        %s534 = smul.addr %s533, 8
        %s535 = scalar_lea.vmem [#allocation2], %s534
        // Predicated region
        $region69: #{tpu_custom_call.1} parent=67 // pred_check
          %p536 = pneg %p63
        $region70: #{tpu_custom_call.1} parent=67 // pred_check_branch
          %538 = sbr.rel (%p536) target = $region72
        $region71: #{tpu_custom_call.1} parent=67 // pred_region
          %540 = dma.done %s532, 128
        $region72: #{tpu_custom_call.1} parent=67 // pred_fallthru
          _
        %s541 = sand.u32 %s42, 1
        %s542 = scalar_lea.sflag [#allocation6], %s541
        %s543 = sand.u32 %s76, 1
        %s544 = smul.addr %s543, 8
        %s545 = scalar_lea.vmem [#allocation5], %s544
        // Predicated region
        $region73: #{tpu_custom_call.1} parent=67 // pred_check
          %p546 = pneg %p89
        $region74: #{tpu_custom_call.1} parent=67 // pred_check_branch
          %548 = sbr.rel (%p546) target = $region76
        $region75: #{tpu_custom_call.1} parent=67 // pred_region
          %550 = dma.done %s542, 128
        $region76: #{tpu_custom_call.1} parent=67 // pred_fallthru
          _
        %s551 = sand.u32 %s42, 1
        %s552 = scalar_lea.sflag [#allocation6], %s551
        %s553 = sand.u32 %s102, 1
        %s554 = smul.addr %s553, 8
        %s555 = scalar_lea.vmem [#allocation7], %s554
        // Predicated region
        $region77: #{tpu_custom_call.1} parent=67 // pred_check
          %p556 = pneg %p115
        $region78: #{tpu_custom_call.1} parent=67 // pred_check_branch
          %558 = sbr.rel (%p556) target = $region80
        $region79: #{tpu_custom_call.1} parent=67 // pred_region
          %560 = dma.done %s552, 128
        $region80: #{tpu_custom_call.1} parent=67 // pred_fallthru
          _
        %s561 = sand.u32 %s42, 1
        %s562 = scalar_lea.sflag [#allocation9], %s561
        %s563 = sand.u32 %s128, 1
        %s564 = smul.addr %s563, 8
        %s565 = scalar_lea.vmem [#allocation8], %s564
        // Predicated region
        $region81: #{tpu_custom_call.1} parent=67 // pred_check
          %p566 = pneg %p141
        $region82: #{tpu_custom_call.1} parent=67 // pred_check_branch
          %568 = sbr.rel (%p566) target = $region84
        $region83: #{tpu_custom_call.1} parent=67 // pred_region
          %570 = dma.done %s562, 128
        $region84: #{tpu_custom_call.1} parent=67 // pred_fallthru
          _
        // Predicated region
        $region85: #{tpu_custom_call.1} parent=67 // pred_check
          %p571 = pneg %p162
        $region86: #{tpu_custom_call.1} parent=67 // pred_check_branch
          %573 = sbr.rel (%p571) target = $region88
        $region87: #{tpu_custom_call.1} parent=67 // pred_region
          %575 = dma.done [#allocation9], 512
        $region88: #{tpu_custom_call.1} parent=67 // pred_fallthru
          _
        // Predicated region
        $region89: #{tpu_custom_call.1} parent=67 // pred_check
          %p576 = pneg %p183
        $region90: #{tpu_custom_call.1} parent=67 // pred_check_branch
          %578 = sbr.rel (%p576) target = $region92
        $region91: #{tpu_custom_call.1} parent=67 // pred_region
          %580 = dma.done [#allocation12], 512
        $region92: #{tpu_custom_call.1} parent=67 // pred_fallthru
          _
        // Predicated region
        $region93: #{tpu_custom_call.1} parent=67 // pred_check
          %p581 = pneg %p204
        $region94: #{tpu_custom_call.1} parent=67 // pred_check_branch
          %583 = sbr.rel (%p581) target = $region96
        $region95: #{tpu_custom_call.1} parent=67 // pred_region
          %585 = dma.done [#allocation12], 512
        $region96: #{tpu_custom_call.1} parent=67 // pred_fallthru
          _
        // Predicated region
        $region97: #{tpu_custom_call.1} parent=67 // pred_check
          %p586 = pneg %p225
        $region98: #{tpu_custom_call.1} parent=67 // pred_check_branch
          %588 = sbr.rel (%p586) target = $region100
        $region99: #{tpu_custom_call.1} parent=67 // pred_region
          %590 = dma.done [#allocation15], 512
        $region100: #{tpu_custom_call.1} parent=67 // pred_fallthru
          _
        %s591 = sand.u32 %s50, 1
        %s592 = scalar_lea.sflag [#allocation3], %s591
        %s593 = sand.u32 %s50, 1
        %s594 = smul.addr %s593, 8
        %s595 = scalar_lea.vmem [#allocation2], %s594
        %p596 = pneg %p63
        %p597 = pneg %p60
        %s598 = sand.u32 %s42, 1
        %s599 = scalar_lea.sflag [#allocation6], %s598
        %s600 = sand.u32 %s76, 1
        %s601 = smul.addr %s600, 8
        %s602 = scalar_lea.vmem [#allocation5], %s601
        %p603 = pneg %p89
        %p604 = pneg %p86
        %s605 = sand.u32 %s42, 1
        %s606 = scalar_lea.sflag [#allocation6], %s605
        %s607 = sand.u32 %s102, 1
        %s608 = smul.addr %s607, 8
        %s609 = scalar_lea.vmem [#allocation7], %s608
        %p610 = pneg %p115
        %p611 = pneg %p112
        %s612 = sand.u32 %s42, 1
        %s613 = scalar_lea.sflag [#allocation9], %s612
        %s614 = sand.u32 %s128, 1
        %s615 = smul.addr %s614, 8
        %s616 = scalar_lea.vmem [#allocation8], %s615
        %p617 = pneg %p141
        %p618 = pneg %p138
        %p619 = pneg %p162
        %p620 = pneg %p159
        %p621 = pneg %p183
        %p622 = pneg %p180
        %p623 = pneg %p204
        %p624 = pneg %p201
        %p625 = pneg %p225
        %p626 = pneg %p222
        %p627 = pneg %p246
        %p628 = pneg %p243
        %p629 = pneg %p267
        %p630 = pneg %p264
        %p631 = pneg %p288
        %p632 = pneg %p285
        %p633 = pneg %p309
        %p634 = pneg %p306
        %p635 = pneg %p335
        %p636 = pneg %p332
        %s637 = sand.u32 %s322, 1
        %s638 = scalar_lea.sflag [#allocation4], %s637
        %s639 = sand.u32 %s322, 1
        %s640 = smul.addr %s639, 8
        %s641 = scalar_lea.vmem [#allocation16], %s640
        %p642 = pneg %p361
        %p643 = pneg %p358
        %s644 = sand.u32 %s348, 1
        %s645 = scalar_lea.sflag [#allocation18], %s644
        %s646 = sand.u32 %s348, 1
        %s647 = smul.addr %s646, 32
        %s648 = scalar_lea.vmem [#allocation17], %s647
        %v649 = vld [vmem:[%s535] sm:$0xff]
        %v650 = vld [vmem:[%s545] sm:$0xff]
        %v651 = vld [vmem:[%s555] sm:$0xff]
        %v652 = vld [vmem:[#allocation10] sm:$0xff]
        %v653 = vld [vmem:[#allocation10 + $0x8] sm:$0xff]
        %v654 = vld [vmem:[#allocation10 + $0x10] sm:$0xff]
        %v655 = vld [vmem:[#allocation10 + $0x18] sm:$0xff]
        %v656 = vld [vmem:[%s8] sm:$0x1]
        %v658 = vperm.slane %v656, 0
        %vm660 = vcmask 261120
        %v662 = vsel %vm660, %v649, 0
        %664 = vmatpush.msra.mxu0 0.0
        %665 = vmatpush.msra.mxu0 0.0
        %666 = vmatpush.msra.mxu0 0.0
        %667 = vmatpush.msra.mxu0 0.0
        %668 = vmatpush.msra.mxu0 0.0
        %669 = vmatpush.msra.mxu0 0.0
        %670 = vmatpush.msra.mxu0 0.0
        %671 = vmatpush.msra.mxu0 0.0
        %672 = vmatpush.msra.mxu0 0.0
        %673 = vmatpush.msra.mxu0 0.0
        %674 = vmatpush.msra.mxu0 0.0
        %675 = vmatpush.msra.mxu0 0.0
        %676 = vmatpush.msra.mxu0 %v655
        %677 = vmatpush.msra.mxu0 %v654
        %678 = vmatpush.msra.mxu0 %v653
        %679 = vmatpush.msra.mxu0 %v652
        %680 = vmatmul.f32.gmra.mxu0 %v662
        %v681 = vpop.f32.mrf.mxu0
        %v682 = vadd.f32 %v658, %v681
        %683 = vdwg.mxu0
        %v684 = vld [vmem:[#allocation11] sm:$0xff]
        %v685 = vld [vmem:[#allocation11 + $0x8] sm:$0xff]
        %v686 = vld [vmem:[#allocation11 + $0x10] sm:$0xff]
        %v687 = vld [vmem:[#allocation11 + $0x18] sm:$0xff]
        %v688 = vld [vmem:[%s9] sm:$0x1]
        %v690 = vperm.slane %v688, 0
        %v693 = vsel %vm660, %v650, 0
        %695 = vmatpush.msra.mxu0 0.0
        %696 = vmatpush.msra.mxu0 0.0
        %697 = vmatpush.msra.mxu0 0.0
        %698 = vmatpush.msra.mxu0 0.0
        %699 = vmatpush.msra.mxu0 0.0
        %700 = vmatpush.msra.mxu0 0.0
        %701 = vmatpush.msra.mxu0 0.0
        %702 = vmatpush.msra.mxu0 0.0
        %703 = vmatpush.msra.mxu0 0.0
        %704 = vmatpush.msra.mxu0 0.0
        %705 = vmatpush.msra.mxu0 0.0
        %706 = vmatpush.msra.mxu0 0.0
        %707 = vmatpush.msra.mxu0 %v687
        %708 = vmatpush.msra.mxu0 %v686
        %709 = vmatpush.msra.mxu0 %v685
        %710 = vmatpush.msra.mxu0 %v684
        %711 = vmatmul.f32.gmra.mxu0 %v693
        %v712 = vpop.f32.mrf.mxu0
        %v713 = vadd.f32 %v690, %v712
        %714 = vdwg.mxu0
        %v715 = vld [vmem:[#allocation13] sm:$0xff]
        %v716 = vld [vmem:[#allocation13 + $0x8] sm:$0xff]
        %v717 = vld [vmem:[#allocation13 + $0x10] sm:$0xff]
        %v718 = vld [vmem:[#allocation13 + $0x18] sm:$0xff]
        %v719 = vld [vmem:[%s10] sm:$0x1]
        %v721 = vperm.slane %v719, 0
        %v724 = vsel %vm660, %v651, 0
        %726 = vmatpush.msra.mxu0 0.0
        %727 = vmatpush.msra.mxu0 0.0
        %728 = vmatpush.msra.mxu0 0.0
        %729 = vmatpush.msra.mxu0 0.0
        %730 = vmatpush.msra.mxu0 0.0
        %731 = vmatpush.msra.mxu0 0.0
        %732 = vmatpush.msra.mxu0 0.0
        %733 = vmatpush.msra.mxu0 0.0
        %734 = vmatpush.msra.mxu0 0.0
        %735 = vmatpush.msra.mxu0 0.0
        %736 = vmatpush.msra.mxu0 0.0
        %737 = vmatpush.msra.mxu0 0.0
        %738 = vmatpush.msra.mxu0 %v718
        %739 = vmatpush.msra.mxu0 %v717
        %740 = vmatpush.msra.mxu0 %v716
        %741 = vmatpush.msra.mxu0 %v715
        %742 = vmatmul.f32.gmra.mxu0 %v724
        %v743 = vpop.f32.mrf.mxu0
        %v744 = vadd.f32 %v721, %v743
        %745 = vdwg.mxu0
        %v746 = vld [vmem:[%s565] sm:$0xff]
        %vm747 = vcmp.eq.s32.totalorder %v746, 0
        %vm748 = vcmask 64512
        %v750 = vsel %vm748, %v682, 0
        %v753 = vsel %vm748, %v713, 0
        %755 = vmatpush.xpose.msra.mxu0 0.0
        %756 = vmatpush.xpose.msra.mxu0 0.0
        %757 = vmatpush.xpose.msra.mxu0 0.0
        %758 = vmatpush.xpose.msra.mxu0 0.0
        %759 = vmatpush.xpose.msra.mxu0 0.0
        %760 = vmatpush.xpose.msra.mxu0 0.0
        %761 = vmatpush.xpose.msra.mxu0 0.0
        %762 = vmatpush.xpose.msra.mxu0 0.0
        %763 = vmatpush.xpose.msra.mxu0 0.0
        %764 = vmatpush.xpose.msra.mxu0 0.0
        %765 = vmatpush.xpose.msra.mxu0 0.0
        %766 = vmatpush.xpose.msra.mxu0 0.0
        %767 = vmatpush.xpose.msra.mxu0 0.0
        %768 = vmatpush.xpose.msra.mxu0 0.0
        %769 = vmatpush.xpose.msra.mxu0 0.0
        %770 = vmatpush.xpose.msra.mxu0 %v753
        %771 = vmatmul.f32.gmra.mxu0 %v750
        %v772 = vpop.f32.mrf.mxu0
        %v773 = vadd.f32 0.0, %v772
        %774 = vdwg.mxu0
        %v775 = vsel %vm747, -1e-12, %v773
        %v776 = vsel %vm748, %v775, -inf
        %777 = vmax.xlane.f32.xlu0 %v776
        %v778 = vpop.xlane.xlu0 %777
        %v779 = vsub.f32 %v775, %v778
        %v780 = vmul.f32 %v779, 1.442695
        %v781 = vpow.pop %v780
        %v782 = vsel %vm748, %v781, 0.0
        %783 = vadd.xlane.f32.xlu0 %v782
        %v784 = vpop.xlane.xlu0 %783
        %v785 = vrcp.pop %v784
        %v786 = vmul.f32 %v781, %v785
        %787 = vst.msk [vmem:[%s648] sm:$0xff] %vm748, %v786
        %v789 = vsel %vm748, %v786, 0
        %791 = vmatpush.msra.mxu0 0.0
        %792 = vmatpush.msra.mxu0 0.0
        %793 = vmatpush.msra.mxu0 0.0
        %794 = vmatpush.msra.mxu0 0.0
        %795 = vmatpush.msra.mxu0 0.0
        %796 = vmatpush.msra.mxu0 0.0
        %797 = vmatpush.msra.mxu0 0.0
        %798 = vmatpush.msra.mxu0 0.0
        %799 = vmatpush.msra.mxu0 0.0
        %800 = vmatpush.msra.mxu0 0.0
        %801 = vmatpush.msra.mxu0 0.0
        %802 = vmatpush.msra.mxu0 0.0
        %803 = vmatpush.msra.mxu0 0.0
        %804 = vmatpush.msra.mxu0 0.0
        %805 = vmatpush.msra.mxu0 0.0
        %806 = vmatpush.msra.mxu0 %v744
        %807 = vmatmul.f32.gmra.mxu0 %v789
        %v808 = vpop.f32.mrf.mxu0
        %v809 = vadd.f32 0.0, %v808
        %810 = vdwg.mxu0
        %811 = vrot.lane.b32.xlu0 %v682, 120
        %v812 = vpop.permute.xlu0 %811
        %813 = vrot.lane.b32.xlu0 %v713, 120
        %v814 = vpop.permute.xlu0 %813
        %v815 = vsel %vm748, %v812, 0
        %v817 = vsel %vm748, %v814, 0
        %819 = vmatpush.xpose.msra.mxu0 0.0
        %820 = vmatpush.xpose.msra.mxu0 0.0
        %821 = vmatpush.xpose.msra.mxu0 0.0
        %822 = vmatpush.xpose.msra.mxu0 0.0
        %823 = vmatpush.xpose.msra.mxu0 0.0
        %824 = vmatpush.xpose.msra.mxu0 0.0
        %825 = vmatpush.xpose.msra.mxu0 0.0
        %826 = vmatpush.xpose.msra.mxu0 0.0
        %827 = vmatpush.xpose.msra.mxu0 0.0
        %828 = vmatpush.xpose.msra.mxu0 0.0
        %829 = vmatpush.xpose.msra.mxu0 0.0
        %830 = vmatpush.xpose.msra.mxu0 0.0
        %831 = vmatpush.xpose.msra.mxu0 0.0
        %832 = vmatpush.xpose.msra.mxu0 0.0
        %833 = vmatpush.xpose.msra.mxu0 0.0
        %834 = vmatpush.xpose.msra.mxu0 %v817
        %835 = vmatmul.f32.gmra.mxu0 %v815
        %v836 = vpop.f32.mrf.mxu0
        %v837 = vadd.f32 0.0, %v836
        %838 = vdwg.mxu0
        %v839 = vsel %vm747, -1e-12, %v837
        %v840 = vsel %vm748, %v839, -inf
        %841 = vmax.xlane.f32.xlu0 %v840
        %v842 = vpop.xlane.xlu0 %841
        %v843 = vsub.f32 %v839, %v842
        %v844 = vmul.f32 %v843, 1.442695
        %v845 = vpow.pop %v844
        %v846 = vsel %vm748, %v845, 0.0
        %847 = vadd.xlane.f32.xlu0 %v846
        %v848 = vpop.xlane.xlu0 %847
        %v849 = vrcp.pop %v848
        %v850 = vmul.f32 %v845, %v849
        %s851 = scalar_lea.vmem %s648, 8 [#allocation17]
        %852 = vst.msk [vmem:[%s851] sm:$0xff] %vm748, %v850
        %854 = vrot.lane.b32.xlu0 %v744, 120
        %v855 = vpop.permute.xlu0 %854
        %v858 = vsel %vm748, %v850, 0
        %860 = vmatpush.msra.mxu0 0.0
        %861 = vmatpush.msra.mxu0 0.0
        %862 = vmatpush.msra.mxu0 0.0
        %863 = vmatpush.msra.mxu0 0.0
        %864 = vmatpush.msra.mxu0 0.0
        %865 = vmatpush.msra.mxu0 0.0
        %866 = vmatpush.msra.mxu0 0.0
        %867 = vmatpush.msra.mxu0 0.0
        %868 = vmatpush.msra.mxu0 0.0
        %869 = vmatpush.msra.mxu0 0.0
        %870 = vmatpush.msra.mxu0 0.0
        %871 = vmatpush.msra.mxu0 0.0
        %872 = vmatpush.msra.mxu0 0.0
        %873 = vmatpush.msra.mxu0 0.0
        %874 = vmatpush.msra.mxu0 0.0
        %875 = vmatpush.msra.mxu0 %v855
        %876 = vmatmul.f32.gmra.mxu0 %v858
        %v877 = vpop.f32.mrf.mxu0
        %v878 = vadd.f32 0.0, %v877
        %879 = vdwg.mxu0
        %880 = vrot.lane.b32.xlu0 %v682, 112
        %v881 = vpop.permute.xlu0 %880
        %882 = vrot.lane.b32.xlu0 %v713, 112
        %v883 = vpop.permute.xlu0 %882
        %v884 = vsel %vm748, %v881, 0
        %v886 = vsel %vm748, %v883, 0
        %888 = vmatpush.xpose.msra.mxu0 0.0
        %889 = vmatpush.xpose.msra.mxu0 0.0
        %890 = vmatpush.xpose.msra.mxu0 0.0
        %891 = vmatpush.xpose.msra.mxu0 0.0
        %892 = vmatpush.xpose.msra.mxu0 0.0
        %893 = vmatpush.xpose.msra.mxu0 0.0
        %894 = vmatpush.xpose.msra.mxu0 0.0
        %895 = vmatpush.xpose.msra.mxu0 0.0
        %896 = vmatpush.xpose.msra.mxu0 0.0
        %897 = vmatpush.xpose.msra.mxu0 0.0
        %898 = vmatpush.xpose.msra.mxu0 0.0
        %899 = vmatpush.xpose.msra.mxu0 0.0
        %900 = vmatpush.xpose.msra.mxu0 0.0
        %901 = vmatpush.xpose.msra.mxu0 0.0
        %902 = vmatpush.xpose.msra.mxu0 0.0
        %903 = vmatpush.xpose.msra.mxu0 %v886
        %904 = vmatmul.f32.gmra.mxu0 %v884
        %v905 = vpop.f32.mrf.mxu0
        %v906 = vadd.f32 0.0, %v905
        %907 = vdwg.mxu0
        %v908 = vsel %vm747, -1e-12, %v906
        %v909 = vsel %vm748, %v908, -inf
        %910 = vmax.xlane.f32.xlu0 %v909
        %v911 = vpop.xlane.xlu0 %910
        %v912 = vsub.f32 %v908, %v911
        %v913 = vmul.f32 %v912, 1.442695
        %v914 = vpow.pop %v913
        %v915 = vsel %vm748, %v914, 0.0
        %916 = vadd.xlane.f32.xlu0 %v915
        %v917 = vpop.xlane.xlu0 %916
        %v918 = vrcp.pop %v917
        %v919 = vmul.f32 %v914, %v918
        %s920 = scalar_lea.vmem %s648, 16 [#allocation17]
        %921 = vst.msk [vmem:[%s920] sm:$0xff] %vm748, %v919
        %922 = vrot.lane.b32.xlu0 %v744, 112
        %v923 = vpop.permute.xlu0 %922
        %v926 = vsel %vm748, %v919, 0
        %928 = vmatpush.msra.mxu0 0.0
        %929 = vmatpush.msra.mxu0 0.0
        %930 = vmatpush.msra.mxu0 0.0
        %931 = vmatpush.msra.mxu0 0.0
        %932 = vmatpush.msra.mxu0 0.0
        %933 = vmatpush.msra.mxu0 0.0
        %934 = vmatpush.msra.mxu0 0.0
        %935 = vmatpush.msra.mxu0 0.0
        %936 = vmatpush.msra.mxu0 0.0
        %937 = vmatpush.msra.mxu0 0.0
        %938 = vmatpush.msra.mxu0 0.0
        %939 = vmatpush.msra.mxu0 0.0
        %940 = vmatpush.msra.mxu0 0.0
        %941 = vmatpush.msra.mxu0 0.0
        %942 = vmatpush.msra.mxu0 0.0
        %943 = vmatpush.msra.mxu0 %v923
        %944 = vmatmul.f32.gmra.mxu0 %v926
        %v945 = vpop.f32.mrf.mxu0
        %v946 = vadd.f32 0.0, %v945
        %947 = vdwg.mxu0
        %948 = vrot.lane.b32.xlu0 %v682, 104
        %v949 = vpop.permute.xlu0 %948
        %950 = vrot.lane.b32.xlu0 %v713, 104
        %v951 = vpop.permute.xlu0 %950
        %v952 = vsel %vm748, %v949, 0
        %v954 = vsel %vm748, %v951, 0
        %956 = vmatpush.xpose.msra.mxu0 0.0
        %957 = vmatpush.xpose.msra.mxu0 0.0
        %958 = vmatpush.xpose.msra.mxu0 0.0
        %959 = vmatpush.xpose.msra.mxu0 0.0
        %960 = vmatpush.xpose.msra.mxu0 0.0
        %961 = vmatpush.xpose.msra.mxu0 0.0
        %962 = vmatpush.xpose.msra.mxu0 0.0
        %963 = vmatpush.xpose.msra.mxu0 0.0
        %964 = vmatpush.xpose.msra.mxu0 0.0
        %965 = vmatpush.xpose.msra.mxu0 0.0
        %966 = vmatpush.xpose.msra.mxu0 0.0
        %967 = vmatpush.xpose.msra.mxu0 0.0
        %968 = vmatpush.xpose.msra.mxu0 0.0
        %969 = vmatpush.xpose.msra.mxu0 0.0
        %970 = vmatpush.xpose.msra.mxu0 0.0
        %971 = vmatpush.xpose.msra.mxu0 %v954
        %972 = vmatmul.f32.gmra.mxu0 %v952
        %v973 = vpop.f32.mrf.mxu0
        %v974 = vadd.f32 0.0, %v973
        %975 = vdwg.mxu0
        %v976 = vsel %vm747, -1e-12, %v974
        %v977 = vsel %vm748, %v976, -inf
        %978 = vmax.xlane.f32.xlu0 %v977
        %v979 = vpop.xlane.xlu0 %978
        %v980 = vsub.f32 %v976, %v979
        %v981 = vmul.f32 %v980, 1.442695
        %v982 = vpow.pop %v981
        %v983 = vsel %vm748, %v982, 0.0
        %984 = vadd.xlane.f32.xlu0 %v983
        %v985 = vpop.xlane.xlu0 %984
        %v986 = vrcp.pop %v985
        %v987 = vmul.f32 %v982, %v986
        %s988 = scalar_lea.vmem %s648, 24 [#allocation17]
        %989 = vst.msk [vmem:[%s988] sm:$0xff] %vm748, %v987
        %990 = vrot.lane.b32.xlu0 %v744, 104
        %v991 = vpop.permute.xlu0 %990
        %v994 = vsel %vm748, %v987, 0
        %996 = vmatpush.msra.mxu0 0.0
        %997 = vmatpush.msra.mxu0 0.0
        %998 = vmatpush.msra.mxu0 0.0
        %999 = vmatpush.msra.mxu0 0.0
        %1000 = vmatpush.msra.mxu0 0.0
        %1001 = vmatpush.msra.mxu0 0.0
        %1002 = vmatpush.msra.mxu0 0.0
        %1003 = vmatpush.msra.mxu0 0.0
        %1004 = vmatpush.msra.mxu0 0.0
        %1005 = vmatpush.msra.mxu0 0.0
        %1006 = vmatpush.msra.mxu0 0.0
        %1007 = vmatpush.msra.mxu0 0.0
        %1008 = vmatpush.msra.mxu0 0.0
        %1009 = vmatpush.msra.mxu0 0.0
        %1010 = vmatpush.msra.mxu0 0.0
        %1011 = vmatpush.msra.mxu0 %v991
        %1012 = vmatmul.f32.gmra.mxu0 %v994
        %v1013 = vpop.f32.mrf.mxu0
        %v1014 = vadd.f32 0.0, %v1013
        %1015 = vdwg.mxu0
        %1017 = vrot.lane.b32.xlu0 %v878, 8
        %v1018 = vpop.permute.xlu0 %1017
        %1021 = vrot.lane.b32.xlu0 %v946, 16
        %v1022 = vpop.permute.xlu0 %1021
        %1025 = vrot.lane.b32.xlu0 %v1014, 24
        %v1026 = vpop.permute.xlu0 %1025
        %v1028 = vsel %vm748, %v809, %v1018
        %vm1029 = vcmask 130048
        %v1030 = vsel %vm1029, %v1028, %v1022
        %vm1031 = vcmask 195584
        %v1032 = vsel %vm1031, %v1030, %v1026
        %v1033 = vld [vmem:[#allocation14] sm:$0xff]
        %v1034 = vld [vmem:[#allocation14 + $0x8] sm:$0xff]
        %v1035 = vld [vmem:[#allocation14 + $0x10] sm:$0xff]
        %v1036 = vld [vmem:[#allocation14 + $0x18] sm:$0xff]
        %v1037 = vld [vmem:[%s11] sm:$0x1]
        %v1039 = vperm.slane %v1037, 0
        %v1042 = vsel %vm660, %v1032, 0
        %1044 = vmatpush.msra.mxu0 0.0
        %1045 = vmatpush.msra.mxu0 0.0
        %1046 = vmatpush.msra.mxu0 0.0
        %1047 = vmatpush.msra.mxu0 0.0
        %1048 = vmatpush.msra.mxu0 0.0
        %1049 = vmatpush.msra.mxu0 0.0
        %1050 = vmatpush.msra.mxu0 0.0
        %1051 = vmatpush.msra.mxu0 0.0
        %1052 = vmatpush.msra.mxu0 0.0
        %1053 = vmatpush.msra.mxu0 0.0
        %1054 = vmatpush.msra.mxu0 0.0
        %1055 = vmatpush.msra.mxu0 0.0
        %1056 = vmatpush.msra.mxu0 %v1036
        %1057 = vmatpush.msra.mxu0 %v1035
        %1058 = vmatpush.msra.mxu0 %v1034
        %1059 = vmatpush.msra.mxu0 %v1033
        %1060 = vmatmul.f32.gmra.mxu0 %v1042
        %v1061 = vpop.f32.mrf.mxu0
        %v1062 = vadd.f32 %v1039, %v1061
        %1063 = vdwg.mxu0
        %1064 = vst.msk [vmem:[%s641] sm:$0xff] %vm660, %v1062
        %s1065 = sand.u32 %s322, 1
        %s1066 = scalar_lea.sflag [#allocation4], %s1065
        %s1067 = sand.u32 %s322, 1
        %s1068 = smul.addr %s1067, 8
        %s1069 = scalar_lea.vmem [#allocation16], %s1068
        %s1070 = sand.u32 %s348, 1
        %s1071 = scalar_lea.sflag [#allocation18], %s1070
        %s1072 = sand.u32 %s348, 1
        %s1073 = smul.addr %s1072, 32
        %s1074 = scalar_lea.vmem [#allocation17], %s1073
        // Predicated region
        $region101: #{tpu_custom_call.1} parent=67 // pred_check
          %p1075 = pneg %p332
        $region102: #{tpu_custom_call.1} parent=67 // pred_check_branch
          %1077 = sbr.rel (%p1075) target = $region104
        $region103: #{tpu_custom_call.1} parent=67 // pred_region
          %1079 = vsyncadd %s1066, 0
          %s1080 = smul.addr %s42, 8
          %s1081 = scalar_lea.hbm %s12, %s1080
          %s1083 = sshll.u32 %s1069, 4
          %s1084 = int_to_ptr.vmem [resolvable:$true] %s1083
          %s1085 = sshll.u32 %s1081, 4
          %s1086 = int_to_ptr.hbm [resolvable:$true] %s1085
          %1088 = dma.vmem_to_hbm [thread:$0]  %s1084, 128, %s1086, %s1066
        $region104: #{tpu_custom_call.1} parent=67 // pred_fallthru
          _
        // Predicated region
        $region105: #{tpu_custom_call.1} parent=67 // pred_check
          %p1089 = pneg %p358
        $region106: #{tpu_custom_call.1} parent=67 // pred_check_branch
          %1091 = sbr.rel (%p1089) target = $region108
        $region107: #{tpu_custom_call.1} parent=67 // pred_region
          %1093 = vsyncadd %s1071, 0
          %s1094 = smul.addr %s42, 4
          %s1095 = smul.addr %s1094, 8
          %s1096 = scalar_lea.hbm %s13, %s1095
          %s1097 = sshll.u32 %s1074, 4
          %s1098 = int_to_ptr.vmem [resolvable:$true] %s1097
          %s1099 = sshll.u32 %s1096, 4
          %s1100 = int_to_ptr.hbm [resolvable:$true] %s1099
          %1105 = dma.vmem_to_hbm [thread:$0]  %s1098, 512, %s1100, %s1071, 128, 128, 8
        $region108: #{tpu_custom_call.1} parent=67 // pred_fallthru
          _
      $region68: #{tpu_custom_call.1} parent=5 // pred_fallthru
        _
      %p1106 = scmp.le.s32.totalorder 2, %s37
      // Predicated region
      $region109: #{tpu_custom_call.1} parent=5 // pred_check
        %p1107 = pneg %p1106
      $region110: #{tpu_custom_call.1} parent=5 // pred_check_branch
        %1109 = sbr.rel (%p1107) target = $region112
      $region111: #{tpu_custom_call.1} parent=5 // pred_region
        %s1110 = ssub.s32 %s37, 2
        // Predicated region
        $region113: #{tpu_custom_call.1} parent=111 // pred_check
          %p1111 = pneg %p338
        $region114: #{tpu_custom_call.1} parent=111 // pred_check_branch
          %1113 = sbr.rel (%p1111) target = $region116
        $region115: #{tpu_custom_call.1} parent=111 // pred_region
          %s1114 = sand.u32 %s323, 1
          %s1115 = scalar_lea.sflag [#allocation4], %s1114
          %s1116 = sand.u32 %s323, 1
          %s1117 = smul.addr %s1116, 8
          %s1118 = scalar_lea.vmem [#allocation16], %s1117
          %1120 = dma.done %s1115, 128
        $region116: #{tpu_custom_call.1} parent=111 // pred_fallthru
          _
        // Predicated region
        $region117: #{tpu_custom_call.1} parent=111 // pred_check
          %p1121 = pneg %p364
        $region118: #{tpu_custom_call.1} parent=111 // pred_check_branch
          %1123 = sbr.rel (%p1121) target = $region120
        $region119: #{tpu_custom_call.1} parent=111 // pred_region
          %s1124 = sand.u32 %s349, 1
          %s1125 = scalar_lea.sflag [#allocation18], %s1124
          %s1126 = sand.u32 %s349, 1
          %s1127 = smul.addr %s1126, 32
          %s1128 = scalar_lea.vmem [#allocation17], %s1127
          %1130 = dma.done %s1125, 512
        $region120: #{tpu_custom_call.1} parent=111 // pred_fallthru
          _
      $region112: #{tpu_custom_call.1} parent=5 // pred_fallthru
        _
    $region6: #{tpu_custom_call.1} parent=1 // loop_footer
      %s41 = sadd.s32 1, %s37
    $region7: #{tpu_custom_call.1} parent=1 // loop_footer_branch
      %36 = sbr.rel target = $region3
    $region8: #{tpu_custom_call.1} parent=1 // loop_exit
      _
    %1131 = vsyncpa [#allocation3], 1
    %s1132 = scalar_lea.sflag [#allocation3], 1
    %1133 = vsyncpa %s1132, 1
    %1134 = vsyncpa [#allocation6], 1
    %s1135 = scalar_lea.sflag [#allocation6], 1
    %1136 = vsyncpa %s1135, 1
    %1137 = vsyncpa [#allocation9], 1
    %s1138 = scalar_lea.sflag [#allocation9], 1
    %1139 = vsyncpa %s1138, 1
    %1140 = vsyncpa [#allocation12], 1
    %1141 = vsyncpa [#allocation15], 1
    %1142 = vsyncpa [#allocation4], 1
    %s1143 = scalar_lea.sflag [#allocation4], 1
    %1144 = vsyncpa %s1143, 1
    %1145 = vsyncpa [#allocation18], 1
    %s1146 = scalar_lea.sflag [#allocation18], 1
    %1147 = vsyncpa %s1146, 1

</llo_original>
